<compile_context>
chip_gen: v5e
topology: v5e:2x2
jax: 0.10.0
libtpu: 0.0.40
codegen_flags: <defaults>
</compile_context>

<pallas_src>
import math
from functools import partial

import numpy as np
import jax
import jax.numpy as jnp
from jax.experimental import pallas as pl
from jax.experimental.pallas import tpu as pltpu


# ----------------------- parameter setup (plain-JAX / numpy glue) -----------------------

def _to_mel(hz):
    return 2595.0 * np.log10(1.0 + hz / 700.0)


def _to_hz(mel):
    return 700.0 * (10.0 ** (mel / 2595.0) - 1.0)


def make_sinc_params(out_channels, kernel_size, sinc_type="s1",
                     sample_rate=16000, min_low_hz=50, min_band_hz=50):
    """Deterministic re-implementation of SincConv_fast.__init__ buffers/params."""
    if kernel_size % 2 == 0:
        kernel_size += 1
    low_hz = 30
    high_hz = sample_rate / 2 - (min_low_hz + min_band_hz)
    if sinc_type == "s1":
        mel = np.linspace(_to_mel(low_hz), _to_mel(high_hz), out_channels + 1)
        hz = _to_hz(mel)
    elif sinc_type == "s3":
        hz = np.linspace(low_hz, high_hz, out_channels + 1)
    else:
        raise NotImplementedError(f"Sinc type {sinc_type} is not supported")

    low_hz_ = hz[:-1].reshape(-1, 1).astype(np.float32)          # (C, 1)
    band_hz_ = np.diff(hz).reshape(-1, 1).astype(np.float32)     # (C, 1)
    n_lin = np.linspace(0.0, kernel_size / 2 - 1, int(kernel_size / 2)).astype(np.float32)
    window_ = (0.54 - 0.46 * np.cos(2 * math.pi * n_lin / kernel_size)).astype(np.float32)
    n = (kernel_size - 1) / 2.0
    n_ = (2 * math.pi * np.arange(-n, 0.0) / sample_rate).reshape(1, -1).astype(np.float32)
    return (kernel_size, jnp.asarray(low_hz_), jnp.asarray(band_hz_),
            jnp.asarray(window_), jnp.asarray(n_))


def build_filters(low_hz_, band_hz_, window_, n_,
                  sample_rate=16000, min_low_hz=50, min_band_hz=50):
    """Filter construction part of SincConv_fast.forward (tiny C x K math)."""
    low = min_low_hz + jnp.abs(low_hz_)                                  # (C, 1)
    high = jnp.clip(low + min_band_hz + jnp.abs(band_hz_),
                    min_low_hz, sample_rate / 2)                         # (C, 1)
    band = (high - low)[:, 0]                                            # (C,)
    f_t_low = low @ n_                                                   # (C, K//2)
    f_t_high = high @ n_                                                 # (C, K//2)
    bp_left = (jnp.sin(f_t_high) - jnp.sin(f_t_low)) / (n_ / 2.0) * window_
    bp_center = 2.0 * band[:, None]                                      # (C, 1)
    bp_right = jnp.flip(bp_left, axis=1)
    bp = jnp.concatenate([bp_left, bp_center, bp_right], axis=1)         # (C, K)
    bp = bp / (2.0 * band[:, None])
    return bp.astype(jnp.float32)                                        # (C, K)


# --------------------------------- Pallas kernels ---------------------------------------

def sinc_conv_pool_kernel(x_cur_ref, x_halo_ref, filt_ref,
                          out_ref, ssum_ref, ssq_ref, xw_ref,
                          *, K, blk_p, chunk_p, halo_p, n_inner, valid_len, sinc_abs):
    """Fused conv1d(sinc) + |.| + MaxPool1d(3) + partial BatchNorm statistics.

    x_cur_ref : (1, 3, blk_p)   phase-split waveform block (row d holds x[3p + d])
    x_halo_ref: (1, 3, halo_p)  first halo_p phase columns of the next block
    filt_ref  : (K, C, chunk_p) sinc filters pre-broadcast along lanes (resident)
    out_ref   : (1, C, blk_p)   pooled block
    ssum_ref/ssq_ref: (1, 1, C, 1) per-(b, t_outer) partial BN statistics
    xw_ref    : (3, blk_p + halo_p) VMEM staging window
    """
    to = pl.program_id(1)
    ti = pl.program_id(2)
    t_global = to * n_inner + ti

    C = filt_ref.shape[1]
    W = chunk_p + halo_p
    n_shift = (K + 1) // 3 + 1          # distinct lane offsets m // 3, m in [0, K+2)
    n_chunks = blk_p // chunk_p

    # Zero the per-(b, t_outer) statistics at the start of the "arbitrary" axis.
    @pl.when(ti == 0)
    def _():
        ssum_ref[...] = jnp.zeros_like(ssum_ref)
        ssq_ref[...] = jnp.zeros_like(ssq_ref)

    # Stage block + halo once into a contiguous window so every chunk below reads a
    # lane-aligned dynamic slice (no unaligned loads in the hot loop).
    xw_ref[:, :blk_p] = x_cur_ref[0]
    xw_ref[:, blk_p:] = x_halo_ref[0]

    def chunk_body(j, carry):
        off = pl.multiple_of(j * chunk_p, chunk_p)
        xw = xw_ref[:, pl.ds(off, W)]                               # (3, W), aligned

        # Shift-and-MAC cross-correlation on the VPU; one accumulator per pooling
        # phase r: acc_r[c, p] = conv[c, 3*(chunk_start + p) + r].
        # Lane shifts go through the XLU (pltpu.roll, hidden under the MAC) and the
        # sublane broadcast of each waveform row is hoisted once per tap-offset m,
        # so the inner loop is pure VALU mul/add against resident (C, chunk_p) filters.
        # TODO(synk): for very long sinc filters (K ~ 1024) switch to an MXU im2col
        # variant instead of this statically unrolled tap loop.
        accs = [jnp.zeros((C, chunk_p), jnp.float32) for _ in range(3)]
        for d in range(n_shift):
            xw_d = xw if d == 0 else pltpu.roll(xw, shift=W - d, axis=1)
            for rr in range(3):
                m = 3 * d + rr
                if m >= K + 2:
                    continue
                xm = jnp.broadcast_to(xw_d[rr:rr + 1, :chunk_p], (C, chunk_p))
                for r in range(3):
                    k = m - r
                    if 0 <= k < K:
                        accs[r] = accs[r] + filt_ref[k] * xm
        if sinc_abs:
            accs = [jnp.abs(a) for a in accs]

        # Fused MaxPool1d(3): elementwise max over the three phases (no intermediate
        # (B, C, T_conv) tensor ever hits HBM).
        pooled = jnp.maximum(jnp.maximum(accs[0], accs[1]), accs[2])    # (C, chunk_p)
        out_ref[0, :, pl.ds(off, chunk_p)] = pooled

        # BatchNorm partial statistics; only chunks touching the padded tail pay for
        # the iota/compare/select mask.
        chunk_start = t_global * blk_p + off

        @pl.when(chunk_start + chunk_p <= valid_len)
        def _():
            ssum_ref[0, 0] = ssum_ref[0, 0] + jnp.sum(pooled, axis=1, keepdims=True)
            ssq_ref[0, 0] = ssq_ref[0, 0] + jnp.sum(pooled * pooled, axis=1, keepdims=True)

        @pl.when(chunk_start + chunk_p > valid_len)
        def _():
            pos = chunk_start + jax.lax.broadcasted_iota(jnp.int32, (1, chunk_p), 1)
            mz = jnp.where(pos < valid_len, pooled, 0.0)
            ssum_ref[0, 0] = ssum_ref[0, 0] + jnp.sum(mz, axis=1, keepdims=True)
            ssq_ref[0, 0] = ssq_ref[0, 0] + jnp.sum(mz * mz, axis=1, keepdims=True)

        return carry

    jax.lax.fori_loop(0, n_chunks, chunk_body, 0)


def bn_lrelu_kernel(x_ref, scale_ref, shift_ref, o_ref, *, neg_slope):
    """Elementwise BatchNorm apply (pre-folded scale/shift) + LeakyReLU.

    x_ref/o_ref: (1, C, tile2)    scale_ref/shift_ref: (1, C, 1)
    """
    y = x_ref[...] * scale_ref[...] + shift_ref[...]
    o_ref[...] = jnp.where(y >= 0.0, y, neg_slope * y)


# ------------------------------------ wrapper --------------------------------------------

def sinc_filters_forward(x, filters, gamma, beta, *,
                         sinc_abs=True, eps=1e-5, neg_slope=0.3,
                         blk_p=2048, chunk_p=256, halo_p=128, n_time_groups=2):
    B, c_in, T = x.shape
    assert c_in == 1, "SincConv only supports one input channel"
    C, K = filters.shape
    assert blk_p % chunk_p == 0 and chunk_p % 128 == 0 and halo_p % 128 == 0
    assert (K + 1) // 3 <= halo_p, "raise halo_p for longer sinc filters"

    T_conv = T - K + 1                      # conv1d: stride=1, padding=0, dilation=1
    Tp = T_conv // 3                        # MaxPool1d(3): stride 3, floor, no padding
    assert Tp >= 1

    n_tiles = -(-Tp // blk_p)               # pooled 2048-lane blocks (partial tail masked)
    # Split the time-tile axis into (parallel outer, arbitrary inner) so both v7x
    # TensorCores get work even when B == 1; each outer group produces partial BN
    # statistics that the tiny plain-JAX finalize below reduces.
    n_outer = max(1, min(n_tiles, n_time_groups))
    n_inner = -(-n_tiles // n_outer)
    n_total = n_outer * n_inner
    Tp_pad = n_total * blk_p

    # Phase-split waveform: x3[b, d, p] = x[b, 0, 3p + d]. The stride-3 relayout is done
    # once here on the tiny single-channel waveform so the kernel never needs strided
    # lane gathers; the per-block halo is only halo_p columns (not a duplicated tile).
    P_in = (n_total + 1) * blk_p
    x_pad = jnp.pad(x, ((0, 0), (0, 0), (0, 3 * P_in - T)))
    x3 = jnp.transpose(x_pad.reshape(B, P_in, 3), (0, 2, 1))            # (B, 3, P_in)
    x_halo = x3.reshape(B, 3, n_total + 1, blk_p)[:, :, 1:, :halo_p]
    x_halo = x_halo.reshape(B, 3, n_total * halo_p)                     # (B, 3, n_total*halo_p)

    # Pre-broadcast filters to (K, C, chunk_p) so every tap in the kernel is a plain
    # VALU mul/add (no per-tap lane splat); constant index_map keeps it VMEM-resident.
    filt_wide = jnp.broadcast_to(filters.T[:, :, None], (K, C, chunk_p)).astype(jnp.float32)

    kernel1 = partial(sinc_conv_pool_kernel, K=K, blk_p=blk_p, chunk_p=chunk_p,
                      halo_p=halo_p, n_inner=n_inner, valid_len=Tp, sinc_abs=sinc_abs)

    pooled_pad, ssum, ssq = pl.pallas_call(
        kernel1,
        # TODO(synk): pooled_pad could be stored as bf16 to halve the write+re-read HBM
        # traffic, but that does not reliably hold the 2e-3 output tolerance post-BN.
        out_shape=(jax.ShapeDtypeStruct((B, C, Tp_pad), jnp.float32),
                   jax.ShapeDtypeStruct((B, n_outer, C, 1), jnp.float32),
                   jax.ShapeDtypeStruct((B, n_outer, C, 1), jnp.float32)),
        grid=(B, n_outer, n_inner),
        in_specs=[
            pl.BlockSpec((1, 3, blk_p), lambda b, to, ti: (b, 0, to * n_inner + ti)),
            pl.BlockSpec((1, 3, halo_p), lambda b, to, ti: (b, 0, to * n_inner + ti)),
            pl.BlockSpec((K, C, chunk_p), lambda b, to, ti: (0, 0, 0)),   # resident filters
        ],
        out_specs=(
            pl.BlockSpec((1, C, blk_p), lambda b, to, ti: (b, 0, to * n_inner + ti)),
            pl.BlockSpec((1, 1, C, 1), lambda b, to, ti: (b, to, 0, 0)),  # partial sum
            pl.BlockSpec((1, 1, C, 1), lambda b, to, ti: (b, to, 0, 0)),  # partial sum sq
        ),
        scratch_shapes=[pltpu.VMEM((3, blk_p + halo_p), jnp.float32)],
        compiler_params=pltpu.CompilerParams(
            dimension_semantics=("parallel", "parallel", "arbitrary")),
    )(x3, x_halo, filt_wide)

    # Finalize BatchNorm1d training-mode batch statistics (tiny (C,) math) and fold
    # gamma/beta into a single per-channel scale/shift for the elementwise kernel.
    count = jnp.float32(B * Tp)
    mean = jnp.sum(ssum[..., 0], axis=(0, 1)) / count                    # (C,)
    var = jnp.maximum(jnp.sum(ssq[..., 0], axis=(0, 1)) / count - mean * mean, 0.0)
    inv = jax.lax.rsqrt(var + eps)
    scale = (gamma * inv).reshape(1, C, 1).astype(jnp.float32)
    shift = (beta - mean * gamma * inv).reshape(1, C, 1).astype(jnp.float32)

    # Elementwise BN-apply + LeakyReLU with wide lane-dense blocks (memory-bound).
    tile2 = blk_p
    n_tiles2 = -(-Tp // tile2)
    out = pl.pallas_call(
        partial(bn_lrelu_kernel, neg_slope=neg_slope),
        out_shape=jax.ShapeDtypeStruct((B, C, Tp), jnp.float32),
        grid=(B, n_tiles2),
        in_specs=[
            pl.BlockSpec((1, C, tile2), lambda b, t: (b, 0, t)),
            pl.BlockSpec((1, C, 1), lambda b, t: (0, 0, 0)),
            pl.BlockSpec((1, C, 1), lambda b, t: (0, 0, 0)),
        ],
        out_specs=pl.BlockSpec((1, C, tile2), lambda b, t: (b, 0, t)),    # partial last
        compiler_params=pltpu.CompilerParams(                             # block is masked
            dimension_semantics=("parallel", "parallel")),
    )(pooled_pad, scale, shift)
    return out


# --------------------------- pure-JAX reference (for checking) ---------------------------

def reference_forward(x, filters, gamma, beta, *, sinc_abs, eps, neg_slope):
    y = jax.lax.conv_general_dilated(
        x, filters[:, None, :], window_strides=(1,), padding="VALID",
        dimension_numbers=("NCH", "OIH", "NCH"),
        precision=jax.lax.Precision.HIGHEST)
    if sinc_abs:
        y = jnp.abs(y)
    B, C, Tc = y.shape
    Tp = Tc // 3
    pooled = jnp.max(y[:, :, :Tp * 3].reshape(B, C, Tp, 3), axis=-1)
    mean = jnp.mean(pooled, axis=(0, 2), keepdims=True)
    var = jnp.mean((pooled - mean) ** 2, axis=(0, 2), keepdims=True)     # biased (training)
    yn = (pooled - mean) * jax.lax.rsqrt(var + eps) * gamma.reshape(1, -1, 1) \
        + beta.reshape(1, -1, 1)
    return jnp.where(yn >= 0.0, yn, neg_slope * yn)


# -------------------------------------- main ---------------------------------------------

if __name__ == "__main__":
    # Small, module-consistent shapes: batch=2, 16 sinc filters, filter length 16 (-> 17),
    # waveform length 8000 samples (multiple 2048-lane pooled blocks, exercises the
    # outer/inner time split, halo handling, and masked-tail statistics).
    B, T = 2, 8000
    sinc_out_channels = 16
    sinc_filter_length = 16
    min_low_hz, min_band_hz = 50, 50
    sinc_abs = True
    sinc_type = "s1"
    eps, neg_slope = 1e-5, 0.3

    K, low_hz_, band_hz_, window_, n_ = make_sinc_params(
        sinc_out_channels, sinc_filter_length, sinc_type,
        sample_rate=16000, min_low_hz=min_low_hz, min_band_hz=min_band_hz)
    filters = build_filters(low_hz_, band_hz_, window_, n_,
                            sample_rate=16000,
                            min_low_hz=min_low_hz, min_band_hz=min_band_hz)   # (C, K)

    # BatchNorm1d deterministic init: weight=1, bias=0 (running stats unused in training mode).
    gamma = jnp.ones((sinc_out_channels,), jnp.float32)
    beta = jnp.zeros((sinc_out_channels,), jnp.float32)

    x = jax.random.normal(jax.random.PRNGKey(0), (B, 1, T), dtype=jnp.float32)

    out = sinc_filters_forward(x, filters, gamma, beta,
                               sinc_abs=sinc_abs, eps=eps, neg_slope=neg_slope)
    out = jax.block_until_ready(out)

    expected_shape = (B, sinc_out_channels, (T - K + 1) // 3)
    assert out.shape == expected_shape, (out.shape, expected_shape)
    assert bool(jnp.all(jnp.isfinite(out)))

    ref = reference_forward(x, filters, gamma, beta,
                            sinc_abs=sinc_abs, eps=eps, neg_slope=neg_slope)
    assert bool(jnp.allclose(out, ref, atol=2e-3, rtol=2e-3)), \
        float(jnp.max(jnp.abs(out - ref)))
    print("KERNEL_OK")
</pallas_src>

<mosaic_0001>
module attributes {stable_mosaic.version = 11 : i64} {
  func.func @sinc_conv_pool_kernel(%arg0: i32, %arg1: i32, %arg2: i32, %arg3: memref<1x3x2048xf32, #tpu.memory_space<vmem>>, %arg4: memref<1x3x128xf32, #tpu.memory_space<vmem>>, %arg5: memref<17x16x256xf32, #tpu.memory_space<vmem>>, %arg6: memref<1x16x2048xf32, #tpu.memory_space<vmem>>, %arg7: memref<1x1x16x1xf32, #tpu.memory_space<vmem>>, %arg8: memref<1x1x16x1xf32, #tpu.memory_space<vmem>>, %arg9: memref<3x2176xf32, #tpu.memory_space<vmem>>) attributes {dimension_semantics = [#tpu.dimension_semantics<parallel>, #tpu.dimension_semantics<parallel>, #tpu.dimension_semantics<arbitrary>], iteration_bounds = array<i64: 2, 2, 1>, scalar_prefetch = 0 : i64, scratch_operands = 1 : i64, tpu.core_type = #tpu.core_type<tc>, window_params = [{transform_indices = @transform_0, window_bounds = array<i64: 1, 3, 2048>}, {transform_indices = @transform_1, window_bounds = array<i64: 1, 3, 128>}, {pipeline_mode = #tpu.pipeline_mode<synchronous>, transform_indices = @transform_2, window_bounds = array<i64: 17, 16, 256>}, {transform_indices = @transform_3, window_bounds = array<i64: 1, 16, 2048>}, {transform_indices = @transform_4, window_bounds = array<i64: 1, 1, 16, 1>}, {transform_indices = @transform_5, window_bounds = array<i64: 1, 1, 16, 1>}]} {
    %c1_i32 = arith.constant 1 : i32
    %0 = arith.muli %arg1, %c1_i32 : i32
    %1 = arith.addi %0, %arg2 : i32
    %c0_i32 = arith.constant 0 : i32
    %2 = arith.cmpi eq, %arg2, %c0_i32 : i32
    %3 = arith.extui %2 : i1 to i32
    %c0_i32_0 = arith.constant 0 : i32
    %4 = arith.cmpi ne, %3, %c0_i32_0 : i32
    scf.if %4 {
      %cst = arith.constant 0.000000e+00 : f32
      %12 = vector.broadcast %cst : f32 to vector<1x1x16x1xf32>
      %c0_12 = arith.constant 0 : index
      %c0_13 = arith.constant 0 : index
      %c0_14 = arith.constant 0 : index
      %c0_15 = arith.constant 0 : index
      %13 = vector.load %arg7[%c0_12, %c0_13, %c0_14, %c0_15] : memref<1x1x16x1xf32, #tpu.memory_space<vmem>>, vector<1x1x16x1xf32>
      tpu.vector_store %arg7[%c0_12, %c0_13, %c0_14, %c0_15], %12 {strides = array<i32>} : memref<1x1x16x1xf32, #tpu.memory_space<vmem>>, vector<1x1x16x1xf32>,
      %cst_16 = arith.constant 0.000000e+00 : f32
      %14 = vector.broadcast %cst_16 : f32 to vector<1x1x16x1xf32>
      %c0_17 = arith.constant 0 : index
      %c0_18 = arith.constant 0 : index
      %c0_19 = arith.constant 0 : index
      %c0_20 = arith.constant 0 : index
      %15 = vector.load %arg8[%c0_17, %c0_18, %c0_19, %c0_20] : memref<1x1x16x1xf32, #tpu.memory_space<vmem>>, vector<1x1x16x1xf32>
      tpu.vector_store %arg8[%c0_17, %c0_18, %c0_19, %c0_20], %14 {strides = array<i32>} : memref<1x1x16x1xf32, #tpu.memory_space<vmem>>, vector<1x1x16x1xf32>,
    } else {
    }
    %c0 = arith.constant 0 : index
    %c0_1 = arith.constant 0 : index
    %c0_2 = arith.constant 0 : index
    %5 = vector.load %arg3[%c0, %c0_1, %c0_2] : memref<1x3x2048xf32, #tpu.memory_space<vmem>>, vector<1x3x2048xf32>
    %6 = vector.shape_cast %5 : vector<1x3x2048xf32> to vector<3x2048xf32>
    %c0_3 = arith.constant 0 : index
    %c0_4 = arith.constant 0 : index
    %7 = vector.load %arg9[%c0_3, %c0_4] : memref<3x2176xf32, #tpu.memory_space<vmem>>, vector<3x2048xf32>
    tpu.vector_store %arg9[%c0_3, %c0_4], %6 {strides = array<i32>} : memref<3x2176xf32, #tpu.memory_space<vmem>>, vector<3x2048xf32>,
    %c0_5 = arith.constant 0 : index
    %c0_6 = arith.constant 0 : index
    %c0_7 = arith.constant 0 : index
    %8 = vector.load %arg4[%c0_5, %c0_6, %c0_7] : memref<1x3x128xf32, #tpu.memory_space<vmem>>, vector<1x3x128xf32>
    %9 = vector.shape_cast %8 : vector<1x3x128xf32> to vector<3x128xf32>
    %c0_8 = arith.constant 0 : index
    %c2048 = arith.constant 2048 : index
    %10 = vector.load %arg9[%c0_8, %c2048] : memref<3x2176xf32, #tpu.memory_space<vmem>>, vector<3x128xf32>
    tpu.vector_store %arg9[%c0_8, %c2048], %9 {strides = array<i32>} : memref<3x2176xf32, #tpu.memory_space<vmem>>, vector<3x128xf32>,
    %c0_i32_9 = arith.constant 0 : i32
    %c8_i32 = arith.constant 8 : i32
    %11 = arith.addi %c0_i32_9, %c8_i32 : i32
    %c1_i32_10 = arith.constant 1 : i32
    scf.for %arg10 = %c0_i32_9 to %11 step %c1_i32_10  : i32 {
      %c256_i32 = arith.constant 256 : i32
      %12 = arith.muli %arg10, %c256_i32 : i32
      %13 = tpu.assume_multiple %12, 256 : i32
      %c0_12 = arith.constant 0 : index
      %14 = arith.index_cast %13 : i32 to index
      %15 = vector.load %arg9[%c0_12, %14] : memref<3x2176xf32, #tpu.memory_space<vmem>>, vector<3x384xf32>
      %cst = arith.constant 0.000000e+00 : f32
      %16 = vector.broadcast %cst : f32 to vector<16x256xf32>
      %cst_13 = arith.constant 0.000000e+00 : f32
      %17 = vector.broadcast %cst_13 : f32 to vector<16x256xf32>
      %cst_14 = arith.constant 0.000000e+00 : f32
      %18 = vector.broadcast %cst_14 : f32 to vector<16x256xf32>
      %19 = vector.extract_strided_slice %15 {offsets = [0, 0], sizes = [1, 256], strides = [1, 1]} : vector<3x384xf32> to vector<1x256xf32>
      %20 = vector.shape_cast %19 : vector<1x256xf32> to vector<1x256xf32>
      %21 = vector.broadcast %20 : vector<1x256xf32> to vector<16x256xf32>
      %c0_15 = arith.constant 0 : index
      %c0_16 = arith.constant 0 : index
      %c0_17 = arith.constant 0 : index
      %22 = vector.load %arg5[%c0_15, %c0_16, %c0_17] : memref<17x16x256xf32, #tpu.memory_space<vmem>>, vector<1x16x256xf32>
      %23 = vector.shape_cast %22 : vector<1x16x256xf32> to vector<16x256xf32>
      %24 = arith.mulf %23, %21 : vector<16x256xf32>
      %25 = arith.addf %16, %24 : vector<16x256xf32>
      %26 = vector.extract_strided_slice %15 {offsets = [1, 0], sizes = [1, 256], strides = [1, 1]} : vector<3x384xf32> to vector<1x256xf32>
      %27 = vector.shape_cast %26 : vector<1x256xf32> to vector<1x256xf32>
      %28 = vector.broadcast %27 : vector<1x256xf32> to vector<16x256xf32>
      %c1 = arith.constant 1 : index
      %c0_18 = arith.constant 0 : index
      %c0_19 = arith.constant 0 : index
      %29 = vector.load %arg5[%c1, %c0_18, %c0_19] : memref<17x16x256xf32, #tpu.memory_space<vmem>>, vector<1x16x256xf32>
      %30 = vector.shape_cast %29 : vector<1x16x256xf32> to vector<16x256xf32>
      %31 = arith.mulf %30, %28 : vector<16x256xf32>
      %32 = arith.addf %25, %31 : vector<16x256xf32>
      %c0_20 = arith.constant 0 : index
      %c0_21 = arith.constant 0 : index
      %c0_22 = arith.constant 0 : index
      %33 = vector.load %arg5[%c0_20, %c0_21, %c0_22] : memref<17x16x256xf32, #tpu.memory_space<vmem>>, vector<1x16x256xf32>
      %34 = vector.shape_cast %33 : vector<1x16x256xf32> to vector<16x256xf32>
      %35 = arith.mulf %34, %28 : vector<16x256xf32>
      %36 = arith.addf %17, %35 : vector<16x256xf32>
      %37 = vector.extract_strided_slice %15 {offsets = [2, 0], sizes = [1, 256], strides = [1, 1]} : vector<3x384xf32> to vector<1x256xf32>
      %38 = vector.shape_cast %37 : vector<1x256xf32> to vector<1x256xf32>
      %39 = vector.broadcast %38 : vector<1x256xf32> to vector<16x256xf32>
      %c2 = arith.constant 2 : index
      %c0_23 = arith.constant 0 : index
      %c0_24 = arith.constant 0 : index
      %40 = vector.load %arg5[%c2, %c0_23, %c0_24] : memref<17x16x256xf32, #tpu.memory_space<vmem>>, vector<1x16x256xf32>
      %41 = vector.shape_cast %40 : vector<1x16x256xf32> to vector<16x256xf32>
      %42 = arith.mulf %41, %39 : vector<16x256xf32>
      %43 = arith.addf %32, %42 : vector<16x256xf32>
      %c1_25 = arith.constant 1 : index
      %c0_26 = arith.constant 0 : index
      %c0_27 = arith.constant 0 : index
      %44 = vector.load %arg5[%c1_25, %c0_26, %c0_27] : memref<17x16x256xf32, #tpu.memory_space<vmem>>, vector<1x16x256xf32>
      %45 = vector.shape_cast %44 : vector<1x16x256xf32> to vector<16x256xf32>
      %46 = arith.mulf %45, %39 : vector<16x256xf32>
      %47 = arith.addf %36, %46 : vector<16x256xf32>
      %c0_28 = arith.constant 0 : index
      %c0_29 = arith.constant 0 : index
      %c0_30 = arith.constant 0 : index
      %48 = vector.load %arg5[%c0_28, %c0_29, %c0_30] : memref<17x16x256xf32, #tpu.memory_space<vmem>>, vector<1x16x256xf32>
      %49 = vector.shape_cast %48 : vector<1x16x256xf32> to vector<16x256xf32>
      %50 = arith.mulf %49, %39 : vector<16x256xf32>
      %51 = arith.addf %18, %50 : vector<16x256xf32>
      %c383_i32 = arith.constant 383 : i32
      %52 = tpu.dynamic_rotate %15 by %c383_i32 dim 1 : vector<3x384xf32>, i32 -> vector<3x384xf32>
      %53 = vector.extract_strided_slice %52 {offsets = [0, 0], sizes = [1, 256], strides = [1, 1]} : vector<3x384xf32> to vector<1x256xf32>
      %54 = vector.shape_cast %53 : vector<1x256xf32> to vector<1x256xf32>
      %55 = vector.broadcast %54 : vector<1x256xf32> to vector<16x256xf32>
      %c3 = arith.constant 3 : index
      %c0_31 = arith.constant 0 : index
      %c0_32 = arith.constant 0 : index
      %56 = vector.load %arg5[%c3, %c0_31, %c0_32] : memref<17x16x256xf32, #tpu.memory_space<vmem>>, vector<1x16x256xf32>
      %57 = vector.shape_cast %56 : vector<1x16x256xf32> to vector<16x256xf32>
      %58 = arith.mulf %57, %55 : vector<16x256xf32>
      %59 = arith.addf %43, %58 : vector<16x256xf32>
      %c2_33 = arith.constant 2 : index
      %c0_34 = arith.constant 0 : index
      %c0_35 = arith.constant 0 : index
      %60 = vector.load %arg5[%c2_33, %c0_34, %c0_35] : memref<17x16x256xf32, #tpu.memory_space<vmem>>, vector<1x16x256xf32>
      %61 = vector.shape_cast %60 : vector<1x16x256xf32> to vector<16x256xf32>
      %62 = arith.mulf %61, %55 : vector<16x256xf32>
      %63 = arith.addf %47, %62 : vector<16x256xf32>
      %c1_36 = arith.constant 1 : index
      %c0_37 = arith.constant 0 : index
      %c0_38 = arith.constant 0 : index
      %64 = vector.load %arg5[%c1_36, %c0_37, %c0_38] : memref<17x16x256xf32, #tpu.memory_space<vmem>>, vector<1x16x256xf32>
      %65 = vector.shape_cast %64 : vector<1x16x256xf32> to vector<16x256xf32>
      %66 = arith.mulf %65, %55 : vector<16x256xf32>
      %67 = arith.addf %51, %66 : vector<16x256xf32>
      %68 = vector.extract_strided_slice %52 {offsets = [1, 0], sizes = [1, 256], strides = [1, 1]} : vector<3x384xf32> to vector<1x256xf32>
      %69 = vector.shape_cast %68 : vector<1x256xf32> to vector<1x256xf32>
      %70 = vector.broadcast %69 : vector<1x256xf32> to vector<16x256xf32>
      %c4 = arith.constant 4 : index
      %c0_39 = arith.constant 0 : index
      %c0_40 = arith.constant 0 : index
      %71 = vector.load %arg5[%c4, %c0_39, %c0_40] : memref<17x16x256xf32, #tpu.memory_space<vmem>>, vector<1x16x256xf32>
      %72 = vector.shape_cast %71 : vector<1x16x256xf32> to vector<16x256xf32>
      %73 = arith.mulf %72, %70 : vector<16x256xf32>
      %74 = arith.addf %59, %73 : vector<16x256xf32>
      %c3_41 = arith.constant 3 : index
      %c0_42 = arith.constant 0 : index
      %c0_43 = arith.constant 0 : index
      %75 = vector.load %arg5[%c3_41, %c0_42, %c0_43] : memref<17x16x256xf32, #tpu.memory_space<vmem>>, vector<1x16x256xf32>
      %76 = vector.shape_cast %75 : vector<1x16x256xf32> to vector<16x256xf32>
      %77 = arith.mulf %76, %70 : vector<16x256xf32>
      %78 = arith.addf %63, %77 : vector<16x256xf32>
      %c2_44 = arith.constant 2 : index
      %c0_45 = arith.constant 0 : index
      %c0_46 = arith.constant 0 : index
      %79 = vector.load %arg5[%c2_44, %c0_45, %c0_46] : memref<17x16x256xf32, #tpu.memory_space<vmem>>, vector<1x16x256xf32>
      %80 = vector.shape_cast %79 : vector<1x16x256xf32> to vector<16x256xf32>
      %81 = arith.mulf %80, %70 : vector<16x256xf32>
      %82 = arith.addf %67, %81 : vector<16x256xf32>
      %83 = vector.extract_strided_slice %52 {offsets = [2, 0], sizes = [1, 256], strides = [1, 1]} : vector<3x384xf32> to vector<1x256xf32>
      %84 = vector.shape_cast %83 : vector<1x256xf32> to vector<1x256xf32>
      %85 = vector.broadcast %84 : vector<1x256xf32> to vector<16x256xf32>
      %c5 = arith.constant 5 : index
      %c0_47 = arith.constant 0 : index
      %c0_48 = arith.constant 0 : index
      %86 = vector.load %arg5[%c5, %c0_47, %c0_48] : memref<17x16x256xf32, #tpu.memory_space<vmem>>, vector<1x16x256xf32>
      %87 = vector.shape_cast %86 : vector<1x16x256xf32> to vector<16x256xf32>
      %88 = arith.mulf %87, %85 : vector<16x256xf32>
      %89 = arith.addf %74, %88 : vector<16x256xf32>
      %c4_49 = arith.constant 4 : index
      %c0_50 = arith.constant 0 : index
      %c0_51 = arith.constant 0 : index
      %90 = vector.load %arg5[%c4_49, %c0_50, %c0_51] : memref<17x16x256xf32, #tpu.memory_space<vmem>>, vector<1x16x256xf32>
      %91 = vector.shape_cast %90 : vector<1x16x256xf32> to vector<16x256xf32>
      %92 = arith.mulf %91, %85 : vector<16x256xf32>
      %93 = arith.addf %78, %92 : vector<16x256xf32>
      %c3_52 = arith.constant 3 : index
      %c0_53 = arith.constant 0 : index
      %c0_54 = arith.constant 0 : index
      %94 = vector.load %arg5[%c3_52, %c0_53, %c0_54] : memref<17x16x256xf32, #tpu.memory_space<vmem>>, vector<1x16x256xf32>
      %95 = vector.shape_cast %94 : vector<1x16x256xf32> to vector<16x256xf32>
      %96 = arith.mulf %95, %85 : vector<16x256xf32>
      %97 = arith.addf %82, %96 : vector<16x256xf32>
      %c382_i32 = arith.constant 382 : i32
      %98 = tpu.dynamic_rotate %15 by %c382_i32 dim 1 : vector<3x384xf32>, i32 -> vector<3x384xf32>
      %99 = vector.extract_strided_slice %98 {offsets = [0, 0], sizes = [1, 256], strides = [1, 1]} : vector<3x384xf32> to vector<1x256xf32>
      %100 = vector.shape_cast %99 : vector<1x256xf32> to vector<1x256xf32>
      %101 = vector.broadcast %100 : vector<1x256xf32> to vector<16x256xf32>
      %c6 = arith.constant 6 : index
      %c0_55 = arith.constant 0 : index
      %c0_56 = arith.constant 0 : index
      %102 = vector.load %arg5[%c6, %c0_55, %c0_56] : memref<17x16x256xf32, #tpu.memory_space<vmem>>, vector<1x16x256xf32>
      %103 = vector.shape_cast %102 : vector<1x16x256xf32> to vector<16x256xf32>
      %104 = arith.mulf %103, %101 : vector<16x256xf32>
      %105 = arith.addf %89, %104 : vector<16x256xf32>
      %c5_57 = arith.constant 5 : index
      %c0_58 = arith.constant 0 : index
      %c0_59 = arith.constant 0 : index
      %106 = vector.load %arg5[%c5_57, %c0_58, %c0_59] : memref<17x16x256xf32, #tpu.memory_space<vmem>>, vector<1x16x256xf32>
      %107 = vector.shape_cast %106 : vector<1x16x256xf32> to vector<16x256xf32>
      %108 = arith.mulf %107, %101 : vector<16x256xf32>
      %109 = arith.addf %93, %108 : vector<16x256xf32>
      %c4_60 = arith.constant 4 : index
      %c0_61 = arith.constant 0 : index
      %c0_62 = arith.constant 0 : index
      %110 = vector.load %arg5[%c4_60, %c0_61, %c0_62] : memref<17x16x256xf32, #tpu.memory_space<vmem>>, vector<1x16x256xf32>
      %111 = vector.shape_cast %110 : vector<1x16x256xf32> to vector<16x256xf32>
      %112 = arith.mulf %111, %101 : vector<16x256xf32>
      %113 = arith.addf %97, %112 : vector<16x256xf32>
      %114 = vector.extract_strided_slice %98 {offsets = [1, 0], sizes = [1, 256], strides = [1, 1]} : vector<3x384xf32> to vector<1x256xf32>
      %115 = vector.shape_cast %114 : vector<1x256xf32> to vector<1x256xf32>
      %116 = vector.broadcast %115 : vector<1x256xf32> to vector<16x256xf32>
      %c7 = arith.constant 7 : index
      %c0_63 = arith.constant 0 : index
      %c0_64 = arith.constant 0 : index
      %117 = vector.load %arg5[%c7, %c0_63, %c0_64] : memref<17x16x256xf32, #tpu.memory_space<vmem>>, vector<1x16x256xf32>
      %118 = vector.shape_cast %117 : vector<1x16x256xf32> to vector<16x256xf32>
      %119 = arith.mulf %118, %116 : vector<16x256xf32>
      %120 = arith.addf %105, %119 : vector<16x256xf32>
      %c6_65 = arith.constant 6 : index
      %c0_66 = arith.constant 0 : index
      %c0_67 = arith.constant 0 : index
      %121 = vector.load %arg5[%c6_65, %c0_66, %c0_67] : memref<17x16x256xf32, #tpu.memory_space<vmem>>, vector<1x16x256xf32>
      %122 = vector.shape_cast %121 : vector<1x16x256xf32> to vector<16x256xf32>
      %123 = arith.mulf %122, %116 : vector<16x256xf32>
      %124 = arith.addf %109, %123 : vector<16x256xf32>
      %c5_68 = arith.constant 5 : index
      %c0_69 = arith.constant 0 : index
      %c0_70 = arith.constant 0 : index
      %125 = vector.load %arg5[%c5_68, %c0_69, %c0_70] : memref<17x16x256xf32, #tpu.memory_space<vmem>>, vector<1x16x256xf32>
      %126 = vector.shape_cast %125 : vector<1x16x256xf32> to vector<16x256xf32>
      %127 = arith.mulf %126, %116 : vector<16x256xf32>
      %128 = arith.addf %113, %127 : vector<16x256xf32>
      %129 = vector.extract_strided_slice %98 {offsets = [2, 0], sizes = [1, 256], strides = [1, 1]} : vector<3x384xf32> to vector<1x256xf32>
      %130 = vector.shape_cast %129 : vector<1x256xf32> to vector<1x256xf32>
      %131 = vector.broadcast %130 : vector<1x256xf32> to vector<16x256xf32>
      %c8 = arith.constant 8 : index
      %c0_71 = arith.constant 0 : index
      %c0_72 = arith.constant 0 : index
      %132 = vector.load %arg5[%c8, %c0_71, %c0_72] : memref<17x16x256xf32, #tpu.memory_space<vmem>>, vector<1x16x256xf32>
      %133 = vector.shape_cast %132 : vector<1x16x256xf32> to vector<16x256xf32>
      %134 = arith.mulf %133, %131 : vector<16x256xf32>
      %135 = arith.addf %120, %134 : vector<16x256xf32>
      %c7_73 = arith.constant 7 : index
      %c0_74 = arith.constant 0 : index
      %c0_75 = arith.constant 0 : index
      %136 = vector.load %arg5[%c7_73, %c0_74, %c0_75] : memref<17x16x256xf32, #tpu.memory_space<vmem>>, vector<1x16x256xf32>
      %137 = vector.shape_cast %136 : vector<1x16x256xf32> to vector<16x256xf32>
      %138 = arith.mulf %137, %131 : vector<16x256xf32>
      %139 = arith.addf %124, %138 : vector<16x256xf32>
      %c6_76 = arith.constant 6 : index
      %c0_77 = arith.constant 0 : index
      %c0_78 = arith.constant 0 : index
      %140 = vector.load %arg5[%c6_76, %c0_77, %c0_78] : memref<17x16x256xf32, #tpu.memory_space<vmem>>, vector<1x16x256xf32>
      %141 = vector.shape_cast %140 : vector<1x16x256xf32> to vector<16x256xf32>
      %142 = arith.mulf %141, %131 : vector<16x256xf32>
      %143 = arith.addf %128, %142 : vector<16x256xf32>
      %c381_i32 = arith.constant 381 : i32
      %144 = tpu.dynamic_rotate %15 by %c381_i32 dim 1 : vector<3x384xf32>, i32 -> vector<3x384xf32>
      %145 = vector.extract_strided_slice %144 {offsets = [0, 0], sizes = [1, 256], strides = [1, 1]} : vector<3x384xf32> to vector<1x256xf32>
      %146 = vector.shape_cast %145 : vector<1x256xf32> to vector<1x256xf32>
      %147 = vector.broadcast %146 : vector<1x256xf32> to vector<16x256xf32>
      %c9 = arith.constant 9 : index
      %c0_79 = arith.constant 0 : index
      %c0_80 = arith.constant 0 : index
      %148 = vector.load %arg5[%c9, %c0_79, %c0_80] : memref<17x16x256xf32, #tpu.memory_space<vmem>>, vector<1x16x256xf32>
      %149 = vector.shape_cast %148 : vector<1x16x256xf32> to vector<16x256xf32>
      %150 = arith.mulf %149, %147 : vector<16x256xf32>
      %151 = arith.addf %135, %150 : vector<16x256xf32>
      %c8_81 = arith.constant 8 : index
      %c0_82 = arith.constant 0 : index
      %c0_83 = arith.constant 0 : index
      %152 = vector.load %arg5[%c8_81, %c0_82, %c0_83] : memref<17x16x256xf32, #tpu.memory_space<vmem>>, vector<1x16x256xf32>
      %153 = vector.shape_cast %152 : vector<1x16x256xf32> to vector<16x256xf32>
      %154 = arith.mulf %153, %147 : vector<16x256xf32>
      %155 = arith.addf %139, %154 : vector<16x256xf32>
      %c7_84 = arith.constant 7 : index
      %c0_85 = arith.constant 0 : index
      %c0_86 = arith.constant 0 : index
      %156 = vector.load %arg5[%c7_84, %c0_85, %c0_86] : memref<17x16x256xf32, #tpu.memory_space<vmem>>, vector<1x16x256xf32>
      %157 = vector.shape_cast %156 : vector<1x16x256xf32> to vector<16x256xf32>
      %158 = arith.mulf %157, %147 : vector<16x256xf32>
      %159 = arith.addf %143, %158 : vector<16x256xf32>
      %160 = vector.extract_strided_slice %144 {offsets = [1, 0], sizes = [1, 256], strides = [1, 1]} : vector<3x384xf32> to vector<1x256xf32>
      %161 = vector.shape_cast %160 : vector<1x256xf32> to vector<1x256xf32>
      %162 = vector.broadcast %161 : vector<1x256xf32> to vector<16x256xf32>
      %c10 = arith.constant 10 : index
      %c0_87 = arith.constant 0 : index
      %c0_88 = arith.constant 0 : index
      %163 = vector.load %arg5[%c10, %c0_87, %c0_88] : memref<17x16x256xf32, #tpu.memory_space<vmem>>, vector<1x16x256xf32>
      %164 = vector.shape_cast %163 : vector<1x16x256xf32> to vector<16x256xf32>
      %165 = arith.mulf %164, %162 : vector<16x256xf32>
      %166 = arith.addf %151, %165 : vector<16x256xf32>
      %c9_89 = arith.constant 9 : index
      %c0_90 = arith.constant 0 : index
      %c0_91 = arith.constant 0 : index
      %167 = vector.load %arg5[%c9_89, %c0_90, %c0_91] : memref<17x16x256xf32, #tpu.memory_space<vmem>>, vector<1x16x256xf32>
      %168 = vector.shape_cast %167 : vector<1x16x256xf32> to vector<16x256xf32>
      %169 = arith.mulf %168, %162 : vector<16x256xf32>
      %170 = arith.addf %155, %169 : vector<16x256xf32>
      %c8_92 = arith.constant 8 : index
      %c0_93 = arith.constant 0 : index
      %c0_94 = arith.constant 0 : index
      %171 = vector.load %arg5[%c8_92, %c0_93, %c0_94] : memref<17x16x256xf32, #tpu.memory_space<vmem>>, vector<1x16x256xf32>
      %172 = vector.shape_cast %171 : vector<1x16x256xf32> to vector<16x256xf32>
      %173 = arith.mulf %172, %162 : vector<16x256xf32>
      %174 = arith.addf %159, %173 : vector<16x256xf32>
      %175 = vector.extract_strided_slice %144 {offsets = [2, 0], sizes = [1, 256], strides = [1, 1]} : vector<3x384xf32> to vector<1x256xf32>
      %176 = vector.shape_cast %175 : vector<1x256xf32> to vector<1x256xf32>
      %177 = vector.broadcast %176 : vector<1x256xf32> to vector<16x256xf32>
      %c11 = arith.constant 11 : index
      %c0_95 = arith.constant 0 : index
      %c0_96 = arith.constant 0 : index
      %178 = vector.load %arg5[%c11, %c0_95, %c0_96] : memref<17x16x256xf32, #tpu.memory_space<vmem>>, vector<1x16x256xf32>
      %179 = vector.shape_cast %178 : vector<1x16x256xf32> to vector<16x256xf32>
      %180 = arith.mulf %179, %177 : vector<16x256xf32>
      %181 = arith.addf %166, %180 : vector<16x256xf32>
      %c10_97 = arith.constant 10 : index
      %c0_98 = arith.constant 0 : index
      %c0_99 = arith.constant 0 : index
      %182 = vector.load %arg5[%c10_97, %c0_98, %c0_99] : memref<17x16x256xf32, #tpu.memory_space<vmem>>, vector<1x16x256xf32>
      %183 = vector.shape_cast %182 : vector<1x16x256xf32> to vector<16x256xf32>
      %184 = arith.mulf %183, %177 : vector<16x256xf32>
      %185 = arith.addf %170, %184 : vector<16x256xf32>
      %c9_100 = arith.constant 9 : index
      %c0_101 = arith.constant 0 : index
      %c0_102 = arith.constant 0 : index
      %186 = vector.load %arg5[%c9_100, %c0_101, %c0_102] : memref<17x16x256xf32, #tpu.memory_space<vmem>>, vector<1x16x256xf32>
      %187 = vector.shape_cast %186 : vector<1x16x256xf32> to vector<16x256xf32>
      %188 = arith.mulf %187, %177 : vector<16x256xf32>
      %189 = arith.addf %174, %188 : vector<16x256xf32>
      %c380_i32 = arith.constant 380 : i32
      %190 = tpu.dynamic_rotate %15 by %c380_i32 dim 1 : vector<3x384xf32>, i32 -> vector<3x384xf32>
      %191 = vector.extract_strided_slice %190 {offsets = [0, 0], sizes = [1, 256], strides = [1, 1]} : vector<3x384xf32> to vector<1x256xf32>
      %192 = vector.shape_cast %191 : vector<1x256xf32> to vector<1x256xf32>
      %193 = vector.broadcast %192 : vector<1x256xf32> to vector<16x256xf32>
      %c12 = arith.constant 12 : index
      %c0_103 = arith.constant 0 : index
      %c0_104 = arith.constant 0 : index
      %194 = vector.load %arg5[%c12, %c0_103, %c0_104] : memref<17x16x256xf32, #tpu.memory_space<vmem>>, vector<1x16x256xf32>
      %195 = vector.shape_cast %194 : vector<1x16x256xf32> to vector<16x256xf32>
      %196 = arith.mulf %195, %193 : vector<16x256xf32>
      %197 = arith.addf %181, %196 : vector<16x256xf32>
      %c11_105 = arith.constant 11 : index
      %c0_106 = arith.constant 0 : index
      %c0_107 = arith.constant 0 : index
      %198 = vector.load %arg5[%c11_105, %c0_106, %c0_107] : memref<17x16x256xf32, #tpu.memory_space<vmem>>, vector<1x16x256xf32>
      %199 = vector.shape_cast %198 : vector<1x16x256xf32> to vector<16x256xf32>
      %200 = arith.mulf %199, %193 : vector<16x256xf32>
      %201 = arith.addf %185, %200 : vector<16x256xf32>
      %c10_108 = arith.constant 10 : index
      %c0_109 = arith.constant 0 : index
      %c0_110 = arith.constant 0 : index
      %202 = vector.load %arg5[%c10_108, %c0_109, %c0_110] : memref<17x16x256xf32, #tpu.memory_space<vmem>>, vector<1x16x256xf32>
      %203 = vector.shape_cast %202 : vector<1x16x256xf32> to vector<16x256xf32>
      %204 = arith.mulf %203, %193 : vector<16x256xf32>
      %205 = arith.addf %189, %204 : vector<16x256xf32>
      %206 = vector.extract_strided_slice %190 {offsets = [1, 0], sizes = [1, 256], strides = [1, 1]} : vector<3x384xf32> to vector<1x256xf32>
      %207 = vector.shape_cast %206 : vector<1x256xf32> to vector<1x256xf32>
      %208 = vector.broadcast %207 : vector<1x256xf32> to vector<16x256xf32>
      %c13 = arith.constant 13 : index
      %c0_111 = arith.constant 0 : index
      %c0_112 = arith.constant 0 : index
      %209 = vector.load %arg5[%c13, %c0_111, %c0_112] : memref<17x16x256xf32, #tpu.memory_space<vmem>>, vector<1x16x256xf32>
      %210 = vector.shape_cast %209 : vector<1x16x256xf32> to vector<16x256xf32>
      %211 = arith.mulf %210, %208 : vector<16x256xf32>
      %212 = arith.addf %197, %211 : vector<16x256xf32>
      %c12_113 = arith.constant 12 : index
      %c0_114 = arith.constant 0 : index
      %c0_115 = arith.constant 0 : index
      %213 = vector.load %arg5[%c12_113, %c0_114, %c0_115] : memref<17x16x256xf32, #tpu.memory_space<vmem>>, vector<1x16x256xf32>
      %214 = vector.shape_cast %213 : vector<1x16x256xf32> to vector<16x256xf32>
      %215 = arith.mulf %214, %208 : vector<16x256xf32>
      %216 = arith.addf %201, %215 : vector<16x256xf32>
      %c11_116 = arith.constant 11 : index
      %c0_117 = arith.constant 0 : index
      %c0_118 = arith.constant 0 : index
      %217 = vector.load %arg5[%c11_116, %c0_117, %c0_118] : memref<17x16x256xf32, #tpu.memory_space<vmem>>, vector<1x16x256xf32>
      %218 = vector.shape_cast %217 : vector<1x16x256xf32> to vector<16x256xf32>
      %219 = arith.mulf %218, %208 : vector<16x256xf32>
      %220 = arith.addf %205, %219 : vector<16x256xf32>
      %221 = vector.extract_strided_slice %190 {offsets = [2, 0], sizes = [1, 256], strides = [1, 1]} : vector<3x384xf32> to vector<1x256xf32>
      %222 = vector.shape_cast %221 : vector<1x256xf32> to vector<1x256xf32>
      %223 = vector.broadcast %222 : vector<1x256xf32> to vector<16x256xf32>
      %c14 = arith.constant 14 : index
      %c0_119 = arith.constant 0 : index
      %c0_120 = arith.constant 0 : index
      %224 = vector.load %arg5[%c14, %c0_119, %c0_120] : memref<17x16x256xf32, #tpu.memory_space<vmem>>, vector<1x16x256xf32>
      %225 = vector.shape_cast %224 : vector<1x16x256xf32> to vector<16x256xf32>
      %226 = arith.mulf %225, %223 : vector<16x256xf32>
      %227 = arith.addf %212, %226 : vector<16x256xf32>
      %c13_121 = arith.constant 13 : index
      %c0_122 = arith.constant 0 : index
      %c0_123 = arith.constant 0 : index
      %228 = vector.load %arg5[%c13_121, %c0_122, %c0_123] : memref<17x16x256xf32, #tpu.memory_space<vmem>>, vector<1x16x256xf32>
      %229 = vector.shape_cast %228 : vector<1x16x256xf32> to vector<16x256xf32>
      %230 = arith.mulf %229, %223 : vector<16x256xf32>
      %231 = arith.addf %216, %230 : vector<16x256xf32>
      %c12_124 = arith.constant 12 : index
      %c0_125 = arith.constant 0 : index
      %c0_126 = arith.constant 0 : index
      %232 = vector.load %arg5[%c12_124, %c0_125, %c0_126] : memref<17x16x256xf32, #tpu.memory_space<vmem>>, vector<1x16x256xf32>
      %233 = vector.shape_cast %232 : vector<1x16x256xf32> to vector<16x256xf32>
      %234 = arith.mulf %233, %223 : vector<16x256xf32>
      %235 = arith.addf %220, %234 : vector<16x256xf32>
      %c379_i32 = arith.constant 379 : i32
      %236 = tpu.dynamic_rotate %15 by %c379_i32 dim 1 : vector<3x384xf32>, i32 -> vector<3x384xf32>
      %237 = vector.extract_strided_slice %236 {offsets = [0, 0], sizes = [1, 256], strides = [1, 1]} : vector<3x384xf32> to vector<1x256xf32>
      %238 = vector.shape_cast %237 : vector<1x256xf32> to vector<1x256xf32>
      %239 = vector.broadcast %238 : vector<1x256xf32> to vector<16x256xf32>
      %c15 = arith.constant 15 : index
      %c0_127 = arith.constant 0 : index
      %c0_128 = arith.constant 0 : index
      %240 = vector.load %arg5[%c15, %c0_127, %c0_128] : memref<17x16x256xf32, #tpu.memory_space<vmem>>, vector<1x16x256xf32>
      %241 = vector.shape_cast %240 : vector<1x16x256xf32> to vector<16x256xf32>
      %242 = arith.mulf %241, %239 : vector<16x256xf32>
      %243 = arith.addf %227, %242 : vector<16x256xf32>
      %c14_129 = arith.constant 14 : index
      %c0_130 = arith.constant 0 : index
      %c0_131 = arith.constant 0 : index
      %244 = vector.load %arg5[%c14_129, %c0_130, %c0_131] : memref<17x16x256xf32, #tpu.memory_space<vmem>>, vector<1x16x256xf32>
      %245 = vector.shape_cast %244 : vector<1x16x256xf32> to vector<16x256xf32>
      %246 = arith.mulf %245, %239 : vector<16x256xf32>
      %247 = arith.addf %231, %246 : vector<16x256xf32>
      %c13_132 = arith.constant 13 : index
      %c0_133 = arith.constant 0 : index
      %c0_134 = arith.constant 0 : index
      %248 = vector.load %arg5[%c13_132, %c0_133, %c0_134] : memref<17x16x256xf32, #tpu.memory_space<vmem>>, vector<1x16x256xf32>
      %249 = vector.shape_cast %248 : vector<1x16x256xf32> to vector<16x256xf32>
      %250 = arith.mulf %249, %239 : vector<16x256xf32>
      %251 = arith.addf %235, %250 : vector<16x256xf32>
      %252 = vector.extract_strided_slice %236 {offsets = [1, 0], sizes = [1, 256], strides = [1, 1]} : vector<3x384xf32> to vector<1x256xf32>
      %253 = vector.shape_cast %252 : vector<1x256xf32> to vector<1x256xf32>
      %254 = vector.broadcast %253 : vector<1x256xf32> to vector<16x256xf32>
      %c16 = arith.constant 16 : index
      %c0_135 = arith.constant 0 : index
      %c0_136 = arith.constant 0 : index
      %255 = vector.load %arg5[%c16, %c0_135, %c0_136] : memref<17x16x256xf32, #tpu.memory_space<vmem>>, vector<1x16x256xf32>
      %256 = vector.shape_cast %255 : vector<1x16x256xf32> to vector<16x256xf32>
      %257 = arith.mulf %256, %254 : vector<16x256xf32>
      %258 = arith.addf %243, %257 : vector<16x256xf32>
      %c15_137 = arith.constant 15 : index
      %c0_138 = arith.constant 0 : index
      %c0_139 = arith.constant 0 : index
      %259 = vector.load %arg5[%c15_137, %c0_138, %c0_139] : memref<17x16x256xf32, #tpu.memory_space<vmem>>, vector<1x16x256xf32>
      %260 = vector.shape_cast %259 : vector<1x16x256xf32> to vector<16x256xf32>
      %261 = arith.mulf %260, %254 : vector<16x256xf32>
      %262 = arith.addf %247, %261 : vector<16x256xf32>
      %c14_140 = arith.constant 14 : index
      %c0_141 = arith.constant 0 : index
      %c0_142 = arith.constant 0 : index
      %263 = vector.load %arg5[%c14_140, %c0_141, %c0_142] : memref<17x16x256xf32, #tpu.memory_space<vmem>>, vector<1x16x256xf32>
      %264 = vector.shape_cast %263 : vector<1x16x256xf32> to vector<16x256xf32>
      %265 = arith.mulf %264, %254 : vector<16x256xf32>
      %266 = arith.addf %251, %265 : vector<16x256xf32>
      %267 = vector.extract_strided_slice %236 {offsets = [2, 0], sizes = [1, 256], strides = [1, 1]} : vector<3x384xf32> to vector<1x256xf32>
      %268 = vector.shape_cast %267 : vector<1x256xf32> to vector<1x256xf32>
      %269 = vector.broadcast %268 : vector<1x256xf32> to vector<16x256xf32>
      %c16_143 = arith.constant 16 : index
      %c0_144 = arith.constant 0 : index
      %c0_145 = arith.constant 0 : index
      %270 = vector.load %arg5[%c16_143, %c0_144, %c0_145] : memref<17x16x256xf32, #tpu.memory_space<vmem>>, vector<1x16x256xf32>
      %271 = vector.shape_cast %270 : vector<1x16x256xf32> to vector<16x256xf32>
      %272 = arith.mulf %271, %269 : vector<16x256xf32>
      %273 = arith.addf %262, %272 : vector<16x256xf32>
      %c15_146 = arith.constant 15 : index
      %c0_147 = arith.constant 0 : index
      %c0_148 = arith.constant 0 : index
      %274 = vector.load %arg5[%c15_146, %c0_147, %c0_148] : memref<17x16x256xf32, #tpu.memory_space<vmem>>, vector<1x16x256xf32>
      %275 = vector.shape_cast %274 : vector<1x16x256xf32> to vector<16x256xf32>
      %276 = arith.mulf %275, %269 : vector<16x256xf32>
      %277 = arith.addf %266, %276 : vector<16x256xf32>
      %c378_i32 = arith.constant 378 : i32
      %278 = tpu.dynamic_rotate %15 by %c378_i32 dim 1 : vector<3x384xf32>, i32 -> vector<3x384xf32>
      %279 = vector.extract_strided_slice %278 {offsets = [0, 0], sizes = [1, 256], strides = [1, 1]} : vector<3x384xf32> to vector<1x256xf32>
      %280 = vector.shape_cast %279 : vector<1x256xf32> to vector<1x256xf32>
      %281 = vector.broadcast %280 : vector<1x256xf32> to vector<16x256xf32>
      %c16_149 = arith.constant 16 : index
      %c0_150 = arith.constant 0 : index
      %c0_151 = arith.constant 0 : index
      %282 = vector.load %arg5[%c16_149, %c0_150, %c0_151] : memref<17x16x256xf32, #tpu.memory_space<vmem>>, vector<1x16x256xf32>
      %283 = vector.shape_cast %282 : vector<1x16x256xf32> to vector<16x256xf32>
      %284 = arith.mulf %283, %281 : vector<16x256xf32>
      %285 = arith.addf %277, %284 : vector<16x256xf32>
      %286 = math.absf %258 : vector<16x256xf32>
      %287 = math.absf %273 : vector<16x256xf32>
      %288 = math.absf %285 : vector<16x256xf32>
      %289 = arith.maximumf %286, %287 : vector<16x256xf32>
      %290 = arith.maximumf %289, %288 : vector<16x256xf32>
      %c0_152 = arith.constant 0 : index
      %c0_153 = arith.constant 0 : index
      %291 = arith.index_cast %13 : i32 to index
      %292 = vector.load %arg6[%c0_152, %c0_153, %291] : memref<1x16x2048xf32, #tpu.memory_space<vmem>>, vector<1x16x256xf32>
      %293 = vector.shape_cast %292 : vector<1x16x256xf32> to vector<16x256xf32>
      %294 = vector.shape_cast %290 : vector<16x256xf32> to vector<1x16x256xf32>
      tpu.vector_store %arg6[%c0_152, %c0_153, %291], %294 {strides = array<i32>} : memref<1x16x2048xf32, #tpu.memory_space<vmem>>, vector<1x16x256xf32>,
      %c2048_i32 = arith.constant 2048 : i32
      %295 = arith.muli %1, %c2048_i32 : i32
      %296 = arith.addi %295, %13 : i32
      %c256_i32_154 = arith.constant 256 : i32
      %297 = arith.addi %296, %c256_i32_154 : i32
      %c2661_i32 = arith.constant 2661 : i32
      %298 = arith.cmpi sle, %297, %c2661_i32 : i32
      %299 = arith.extui %298 : i1 to i32
      %c0_i32_155 = arith.constant 0 : i32
      %300 = arith.cmpi ne, %299, %c0_i32_155 : i32
      scf.if %300 {
        %c0_159 = arith.constant 0 : index
        %c0_160 = arith.constant 0 : index
        %c0_161 = arith.constant 0 : index
        %c0_162 = arith.constant 0 : index
        %305 = vector.load %arg7[%c0_159, %c0_160, %c0_161, %c0_162] : memref<1x1x16x1xf32, #tpu.memory_space<vmem>>, vector<1x1x16x1xf32>
        %306 = vector.shape_cast %305 : vector<1x1x16x1xf32> to vector<16x1xf32>
        %cst_163 = arith.constant dense<0.000000e+00> : vector<16xf32>
        %307 = vector.multi_reduction <add>, %290, %cst_163 [1] : vector<16x256xf32> to vector<16xf32>
        %308 = vector.shape_cast %307 : vector<16xf32> to vector<16x1xf32>
        %309 = arith.addf %306, %308 : vector<16x1xf32>
        %c0_164 = arith.constant 0 : index
        %c0_165 = arith.constant 0 : index
        %c0_166 = arith.constant 0 : index
        %c0_167 = arith.constant 0 : index
        %310 = vector.load %arg7[%c0_164, %c0_165, %c0_166, %c0_167] : memref<1x1x16x1xf32, #tpu.memory_space<vmem>>, vector<1x1x16x1xf32>
        %311 = vector.shape_cast %310 : vector<1x1x16x1xf32> to vector<16x1xf32>
        %312 = vector.shape_cast %309 : vector<16x1xf32> to vector<1x1x16x1xf32>
        tpu.vector_store %arg7[%c0_164, %c0_165, %c0_166, %c0_167], %312 {strides = array<i32>} : memref<1x1x16x1xf32, #tpu.memory_space<vmem>>, vector<1x1x16x1xf32>,
        %c0_168 = arith.constant 0 : index
        %c0_169 = arith.constant 0 : index
        %c0_170 = arith.constant 0 : index
        %c0_171 = arith.constant 0 : index
        %313 = vector.load %arg8[%c0_168, %c0_169, %c0_170, %c0_171] : memref<1x1x16x1xf32, #tpu.memory_space<vmem>>, vector<1x1x16x1xf32>
        %314 = vector.shape_cast %313 : vector<1x1x16x1xf32> to vector<16x1xf32>
        %315 = arith.mulf %290, %290 : vector<16x256xf32>
        %cst_172 = arith.constant dense<0.000000e+00> : vector<16xf32>
        %316 = vector.multi_reduction <add>, %315, %cst_172 [1] : vector<16x256xf32> to vector<16xf32>
        %317 = vector.shape_cast %316 : vector<16xf32> to vector<16x1xf32>
        %318 = arith.addf %314, %317 : vector<16x1xf32>
        %c0_173 = arith.constant 0 : index
        %c0_174 = arith.constant 0 : index
        %c0_175 = arith.constant 0 : index
        %c0_176 = arith.constant 0 : index
        %319 = vector.load %arg8[%c0_173, %c0_174, %c0_175, %c0_176] : memref<1x1x16x1xf32, #tpu.memory_space<vmem>>, vector<1x1x16x1xf32>
        %320 = vector.shape_cast %319 : vector<1x1x16x1xf32> to vector<16x1xf32>
        %321 = vector.shape_cast %318 : vector<16x1xf32> to vector<1x1x16x1xf32>
        tpu.vector_store %arg8[%c0_173, %c0_174, %c0_175, %c0_176], %321 {strides = array<i32>} : memref<1x1x16x1xf32, #tpu.memory_space<vmem>>, vector<1x1x16x1xf32>,
      } else {
      }
      %c256_i32_156 = arith.constant 256 : i32
      %301 = arith.addi %296, %c256_i32_156 : i32
      %c2661_i32_157 = arith.constant 2661 : i32
      %302 = arith.cmpi sgt, %301, %c2661_i32_157 : i32
      %303 = arith.extui %302 : i1 to i32
      %c0_i32_158 = arith.constant 0 : i32
      %304 = arith.cmpi ne, %303, %c0_i32_158 : i32
      scf.if %304 {
        %305 = tpu.iota {dimensions = array<i32: 1>} : vector<1x256xi32>
        %306 = vector.broadcast %296 : i32 to vector<1x256xi32>
        %307 = arith.addi %306, %305 : vector<1x256xi32>
        %c2661_i32_159 = arith.constant 2661 : i32
        %308 = vector.broadcast %c2661_i32_159 : i32 to vector<1x256xi32>
        %309 = arith.cmpi slt, %307, %308 : vector<1x256xi32>
        %cst_160 = arith.constant 0.000000e+00 : f32
        %310 = vector.shape_cast %309 : vector<1x256xi1> to vector<1x256xi1>
        %311 = vector.broadcast %310 : vector<1x256xi1> to vector<16x256xi1>
        %312 = vector.broadcast %cst_160 : f32 to vector<16x256xf32>
        %313 = arith.select %311, %290, %312 : vector<16x256xi1>, vector<16x256xf32>
        %c0_161 = arith.constant 0 : index
        %c0_162 = arith.constant 0 : index
        %c0_163 = arith.constant 0 : index
        %c0_164 = arith.constant 0 : index
        %314 = vector.load %arg7[%c0_161, %c0_162, %c0_163, %c0_164] : memref<1x1x16x1xf32, #tpu.memory_space<vmem>>, vector<1x1x16x1xf32>
        %315 = vector.shape_cast %314 : vector<1x1x16x1xf32> to vector<16x1xf32>
        %cst_165 = arith.constant dense<0.000000e+00> : vector<16xf32>
        %316 = vector.multi_reduction <add>, %313, %cst_165 [1] : vector<16x256xf32> to vector<16xf32>
        %317 = vector.shape_cast %316 : vector<16xf32> to vector<16x1xf32>
        %318 = arith.addf %315, %317 : vector<16x1xf32>
        %c0_166 = arith.constant 0 : index
        %c0_167 = arith.constant 0 : index
        %c0_168 = arith.constant 0 : index
        %c0_169 = arith.constant 0 : index
        %319 = vector.load %arg7[%c0_166, %c0_167, %c0_168, %c0_169] : memref<1x1x16x1xf32, #tpu.memory_space<vmem>>, vector<1x1x16x1xf32>
        %320 = vector.shape_cast %319 : vector<1x1x16x1xf32> to vector<16x1xf32>
        %321 = vector.shape_cast %318 : vector<16x1xf32> to vector<1x1x16x1xf32>
        tpu.vector_store %arg7[%c0_166, %c0_167, %c0_168, %c0_169], %321 {strides = array<i32>} : memref<1x1x16x1xf32, #tpu.memory_space<vmem>>, vector<1x1x16x1xf32>,
        %c0_170 = arith.constant 0 : index
        %c0_171 = arith.constant 0 : index
        %c0_172 = arith.constant 0 : index
        %c0_173 = arith.constant 0 : index
        %322 = vector.load %arg8[%c0_170, %c0_171, %c0_172, %c0_173] : memref<1x1x16x1xf32, #tpu.memory_space<vmem>>, vector<1x1x16x1xf32>
        %323 = vector.shape_cast %322 : vector<1x1x16x1xf32> to vector<16x1xf32>
        %324 = arith.mulf %313, %313 : vector<16x256xf32>
        %cst_174 = arith.constant dense<0.000000e+00> : vector<16xf32>
        %325 = vector.multi_reduction <add>, %324, %cst_174 [1] : vector<16x256xf32> to vector<16xf32>
        %326 = vector.shape_cast %325 : vector<16xf32> to vector<16x1xf32>
        %327 = arith.addf %323, %326 : vector<16x1xf32>
        %c0_175 = arith.constant 0 : index
        %c0_176 = arith.constant 0 : index
        %c0_177 = arith.constant 0 : index
        %c0_178 = arith.constant 0 : index
        %328 = vector.load %arg8[%c0_175, %c0_176, %c0_177, %c0_178] : memref<1x1x16x1xf32, #tpu.memory_space<vmem>>, vector<1x1x16x1xf32>
        %329 = vector.shape_cast %328 : vector<1x1x16x1xf32> to vector<16x1xf32>
        %330 = vector.shape_cast %327 : vector<16x1xf32> to vector<1x1x16x1xf32>
        tpu.vector_store %arg8[%c0_175, %c0_176, %c0_177, %c0_178], %330 {strides = array<i32>} : memref<1x1x16x1xf32, #tpu.memory_space<vmem>>, vector<1x1x16x1xf32>,
      } else {
      }
    }
    %c8_i32_11 = arith.constant 8 : i32
    return
  }
  func.func @transform_0(%arg0: i32, %arg1: i32, %arg2: i32) -> (i32, i32, i32) {
    %c1_i32 = arith.constant 1 : i32
    %0 = arith.muli %arg1, %c1_i32 : i32
    %1 = arith.addi %0, %arg2 : i32
    %c0_i32 = arith.constant 0 : i32
    %c0_i32_0 = arith.constant 0 : i32
    return %arg0, %c0_i32, %1 : i32, i32, i32
  }
  func.func @transform_1(%arg0: i32, %arg1: i32, %arg2: i32) -> (i32, i32, i32) {
    %c1_i32 = arith.constant 1 : i32
    %0 = arith.muli %arg1, %c1_i32 : i32
    %1 = arith.addi %0, %arg2 : i32
    %c0_i32 = arith.constant 0 : i32
    %c0_i32_0 = arith.constant 0 : i32
    return %arg0, %c0_i32, %1 : i32, i32, i32
  }
  func.func @transform_2(%arg0: i32, %arg1: i32, %arg2: i32) -> (i32, i32, i32) {
    %c0_i32 = arith.constant 0 : i32
    %c0_i32_0 = arith.constant 0 : i32
    %c0_i32_1 = arith.constant 0 : i32
    %c0_i32_2 = arith.constant 0 : i32
    return %c0_i32, %c0_i32_0, %c0_i32_1 : i32, i32, i32
  }
  func.func @transform_3(%arg0: i32, %arg1: i32, %arg2: i32) -> (i32, i32, i32) {
    %c1_i32 = arith.constant 1 : i32
    %0 = arith.muli %arg1, %c1_i32 : i32
    %1 = arith.addi %0, %arg2 : i32
    %c0_i32 = arith.constant 0 : i32
    %c0_i32_0 = arith.constant 0 : i32
    return %arg0, %c0_i32, %1 : i32, i32, i32
  }
  func.func @transform_4(%arg0: i32, %arg1: i32, %arg2: i32) -> (i32, i32, i32, i32) {
    %c0_i32 = arith.constant 0 : i32
    %c0_i32_0 = arith.constant 0 : i32
    %c0_i32_1 = arith.constant 0 : i32
    return %arg0, %arg1, %c0_i32, %c0_i32_0 : i32, i32, i32, i32
  }
  func.func @transform_5(%arg0: i32, %arg1: i32, %arg2: i32) -> (i32, i32, i32, i32) {
    %c0_i32 = arith.constant 0 : i32
    %c0_i32_0 = arith.constant 0 : i32
    %c0_i32_1 = arith.constant 0 : i32
    return %arg0, %arg1, %c0_i32, %c0_i32_0 : i32, i32, i32, i32
  }
}

</mosaic_0001>

<llo_original>
// kernel: tpu_custom_call.1
$region0: #{tpu_custom_call.1}
  #allocation0 [shape = 'u32[]', space=smem, size = 0x4, offset = 0x4, fixed_abs, tag = 'smem constant byte address 0x4 - core index']
  #allocation1 [shape = 'u32[72,128]{1,0:T(1,128)}', space=vmem, size = 0x9000, scoped, tag = 'internal scratch']
  #allocation2 [shape = 'f32[3,2176]{1,0:T(4,128)}', space=vmem, size = 0x8800, scoped, tag = 'scratch operand']
  %s0 = inlined_call_operand.vmem [shape: f32[2,3,6144], index: 0, kind: input, shape index: {}]
  %s1 = inlined_call_operand.vmem [shape: f32[2,3,256], index: 1, kind: input, shape index: {}]
  %s2 = inlined_call_operand.vmem [shape: f32[17,16,256], index: 2, kind: input, shape index: {}]
  %s3 = inlined_call_operand.hbm [shape: f32[2,16,4096], index: 3, kind: output, shape index: {0}]
  %s4 = inlined_call_operand.vmem [shape: f32[2,2,16,1], index: 4, kind: output, shape index: {1}]
  %s5 = inlined_call_operand.vmem [shape: f32[2,2,16,1], index: 5, kind: output, shape index: {2}]
  %6 = xla_tuple %s3, %s4, %s5
  %s7 = sld [smem:[#allocation0]]
  $region80: #{tpu_custom_call.1} parent=0
    _
  %s9 = ssub.s32 1, %s7
  %s10 = scalar_select 0, %s9, %s7
  $region1: #{tpu_custom_call.1} parent=0
    #allocation3 [shape = 'u8[262144]{0}', space=vmem, size = 0x40000, scoped, tag = 'output window, operand 0']
    #allocation4 [shape = 's32[2]{0}', space=sflag, size = 0x8, scoped, tag = 'scoped memory for tpu_custom_call.1']
    %11 = vsyncpa [#allocation4], 0
    %s12 = scalar_lea.sflag [#allocation4], 1
    %13 = vsyncpa %s12, 0
    loop: start=0, step=1, limit=6
    $region2: #{tpu_custom_call.1} parent=1 // loop_pre_header
      _
    $region3: #{tpu_custom_call.1} parent=1 // loop_header
      %s15 = sphi 0, %s19
      %p16 = scmp.ge.s32.totalorder %s15, 6
      %s22 = sphi 0, %s41
      %s23 = sphi 0, %s37
      %s24 = sphi 0, %s33
      %s25 = sphi 0, %s22
      %s26 = sphi 0, %s23
      %s27 = sphi 0, %s24
      %s28 = sphi 0, %s25
      %s29 = sphi 0, %s26
      %s30 = sphi 0, %s27
      %s48 = sphi 0, %s50
      %s51 = sphi 0, %s48
      %s52 = sphi 0, %s51
      %s68 = sphi 0, %s52
      %s78 = sphi 0, %s80
      %s81 = sphi 0, %s78
      %s82 = sphi 0, %s81
      %s98 = sphi 0, %s82
      %s102 = sphi 0, %s102
      %s104 = sphi 0, %s102
      %s105 = sphi 0, %s104
      %s119 = sphi 0, %s105
      %s129 = sphi 0, %s131
      %s132 = sphi 0, %s129
      %s133 = sphi 0, %s132
      %s149 = sphi 0, %s133
      %s157 = sphi 0, %s159
      %s160 = sphi 0, %s157
      %s161 = sphi 0, %s160
      %s177 = sphi 0, %s161
      %s185 = sphi 0, %s187
      %s188 = sphi 0, %s185
      %s189 = sphi 0, %s188
      %s205 = sphi 0, %s189
    $region4: #{tpu_custom_call.1} parent=1 // loop_header_branch
      %18 = sbr.rel (%p16) target = $region8
    $region5: #{tpu_custom_call.1} parent=1 // loop_body
      %s20 = ssub.s32 %s15, 1
      %s21 = ssub.s32 %s15, 2
      %s31 = sadd.s32 1, %s24
      %p32 = scmp.ge.s32.totalorder %s31, 1
      %s33 = scalar_select %p32, 0, %s31
      %s34 = sadd.s32 1, %s23
      %s35 = scalar_select %p32, %s34, %s23
      %p36 = scmp.ge.s32.totalorder %s35, 2
      %s37 = scalar_select %p36, 0, %s35
      %s38 = sadd.s32 1, %s22
      %s39 = scalar_select %p36, %s38, %s22
      %p40 = scmp.ge.s32.totalorder %s39, 2
      %s41 = scalar_select %p40, 0, %s39
      %s42 = sadd.s32 %s23, %s24
      %s43 = sadd.s32 %s37, %s33
      %s44 = ssub.s32 %s22, %s41
      %s45 = ssub.s32 %s42, %s43
      %s46 = sor.u32 %s44, %s45
      %p47 = scmp.eq.s32.totalorder %s46, 0
      %s49 = sadd.s32 %s48, 1
      %s50 = scalar_select %p47, %s48, %s49
      %p53 = pneg %p47
      %p54 = scmp.eq.s32.totalorder %s15, 3
      %p55 = por %p53, %p54
      %p56 = scmp.ne.s32.totalorder %s48, %s51
      %p57 = scmp.eq.s32.totalorder %s15, 0
      %p58 = por %p56, %p57
      %p59 = scmp.ne.s32.totalorder %s48, %s51
      %p60 = scmp.eq.s32.totalorder %s20, 3
      %p61 = por %p59, %p60
      %p62 = scmp.ne.s32.totalorder %s51, %s52
      %p63 = scmp.eq.s32.totalorder %s20, 0
      %p64 = por %p62, %p63
      %p65 = scmp.ne.s32.totalorder %s51, %s52
      %p66 = scmp.eq.s32.totalorder %s21, 3
      %p67 = por %p65, %p66
      %p69 = scmp.ne.s32.totalorder %s52, %s68
      %p70 = scmp.eq.s32.totalorder %s21, 0
      %p71 = por %p69, %p70
      %s72 = sadd.s32 %s23, %s24
      %s73 = sadd.s32 %s37, %s33
      %s74 = ssub.s32 %s22, %s41
      %s75 = ssub.s32 %s72, %s73
      %s76 = sor.u32 %s74, %s75
      %p77 = scmp.eq.s32.totalorder %s76, 0
      %s79 = sadd.s32 %s78, 1
      %s80 = scalar_select %p77, %s78, %s79
      %p83 = pneg %p77
      %p84 = scmp.eq.s32.totalorder %s15, 3
      %p85 = por %p83, %p84
      %p86 = scmp.ne.s32.totalorder %s78, %s81
      %p87 = scmp.eq.s32.totalorder %s15, 0
      %p88 = por %p86, %p87
      %p89 = scmp.ne.s32.totalorder %s78, %s81
      %p90 = scmp.eq.s32.totalorder %s20, 3
      %p91 = por %p89, %p90
      %p92 = scmp.ne.s32.totalorder %s81, %s82
      %p93 = scmp.eq.s32.totalorder %s20, 0
      %p94 = por %p92, %p93
      %p95 = scmp.ne.s32.totalorder %s81, %s82
      %p96 = scmp.eq.s32.totalorder %s21, 3
      %p97 = por %p95, %p96
      %p99 = scmp.ne.s32.totalorder %s82, %s98
      %p100 = scmp.eq.s32.totalorder %s21, 0
      %p101 = por %p99, %p100
      %s103 = sadd.s32 %s102, 1
      %p106 = scmp.eq.s32.totalorder %s15, 3
      %p107 = scmp.ne.s32.totalorder %s102, %s104
      %p108 = scmp.eq.s32.totalorder %s15, 0
      %p109 = por %p107, %p108
      %p110 = scmp.ne.s32.totalorder %s102, %s104
      %p111 = scmp.eq.s32.totalorder %s20, 3
      %p112 = por %p110, %p111
      %p113 = scmp.ne.s32.totalorder %s104, %s105
      %p114 = scmp.eq.s32.totalorder %s20, 0
      %p115 = por %p113, %p114
      %p116 = scmp.ne.s32.totalorder %s104, %s105
      %p117 = scmp.eq.s32.totalorder %s21, 3
      %p118 = por %p116, %p117
      %p120 = scmp.ne.s32.totalorder %s105, %s119
      %p121 = scmp.eq.s32.totalorder %s21, 0
      %p122 = por %p120, %p121
      %s123 = sadd.s32 %s23, %s24
      %s124 = sadd.s32 %s37, %s33
      %s125 = ssub.s32 %s22, %s41
      %s126 = ssub.s32 %s123, %s124
      %s127 = sor.u32 %s125, %s126
      %p128 = scmp.eq.s32.totalorder %s127, 0
      %s130 = sadd.s32 %s129, 1
      %s131 = scalar_select %p128, %s129, %s130
      %p134 = pneg %p128
      %p135 = scmp.eq.s32.totalorder %s15, 3
      %p136 = por %p134, %p135
      %p137 = scmp.ne.s32.totalorder %s129, %s132
      %p138 = scmp.eq.s32.totalorder %s15, 0
      %p139 = por %p137, %p138
      %p140 = scmp.ne.s32.totalorder %s129, %s132
      %p141 = scmp.eq.s32.totalorder %s20, 3
      %p142 = por %p140, %p141
      %p143 = scmp.ne.s32.totalorder %s132, %s133
      %p144 = scmp.eq.s32.totalorder %s20, 0
      %p145 = por %p143, %p144
      %p146 = scmp.ne.s32.totalorder %s132, %s133
      %p147 = scmp.eq.s32.totalorder %s21, 3
      %p148 = por %p146, %p147
      %p150 = scmp.ne.s32.totalorder %s133, %s149
      %p151 = scmp.eq.s32.totalorder %s21, 0
      %p152 = por %p150, %p151
      %s153 = ssub.s32 %s22, %s41
      %s154 = ssub.s32 %s23, %s37
      %s155 = sor.u32 %s153, %s154
      %p156 = scmp.eq.s32.totalorder %s155, 0
      %s158 = sadd.s32 %s157, 1
      %s159 = scalar_select %p156, %s157, %s158
      %p162 = pneg %p156
      %p163 = scmp.eq.s32.totalorder %s15, 3
      %p164 = por %p162, %p163
      %p165 = scmp.ne.s32.totalorder %s157, %s160
      %p166 = scmp.eq.s32.totalorder %s15, 0
      %p167 = por %p165, %p166
      %p168 = scmp.ne.s32.totalorder %s157, %s160
      %p169 = scmp.eq.s32.totalorder %s20, 3
      %p170 = por %p168, %p169
      %p171 = scmp.ne.s32.totalorder %s160, %s161
      %p172 = scmp.eq.s32.totalorder %s20, 0
      %p173 = por %p171, %p172
      %p174 = scmp.ne.s32.totalorder %s160, %s161
      %p175 = scmp.eq.s32.totalorder %s21, 3
      %p176 = por %p174, %p175
      %p178 = scmp.ne.s32.totalorder %s161, %s177
      %p179 = scmp.eq.s32.totalorder %s21, 0
      %p180 = por %p178, %p179
      %s181 = ssub.s32 %s22, %s41
      %s182 = ssub.s32 %s23, %s37
      %s183 = sor.u32 %s181, %s182
      %p184 = scmp.eq.s32.totalorder %s183, 0
      %s186 = sadd.s32 %s185, 1
      %s187 = scalar_select %p184, %s185, %s186
      %p190 = pneg %p184
      %p191 = scmp.eq.s32.totalorder %s15, 3
      %p192 = por %p190, %p191
      %p193 = scmp.ne.s32.totalorder %s185, %s188
      %p194 = scmp.eq.s32.totalorder %s15, 0
      %p195 = por %p193, %p194
      %p196 = scmp.ne.s32.totalorder %s185, %s188
      %p197 = scmp.eq.s32.totalorder %s20, 3
      %p198 = por %p196, %p197
      %p199 = scmp.ne.s32.totalorder %s188, %s189
      %p200 = scmp.eq.s32.totalorder %s20, 0
      %p201 = por %p199, %p200
      %p202 = scmp.ne.s32.totalorder %s188, %s189
      %p203 = scmp.eq.s32.totalorder %s21, 3
      %p204 = por %p202, %p203
      %p206 = scmp.ne.s32.totalorder %s189, %s205
      %p207 = scmp.eq.s32.totalorder %s21, 0
      %p208 = por %p206, %p207
      %p209 = scmp.le.s32.totalorder 1, %s15
      %p210 = scmp.lt.s32.totalorder %s15, 5
      %p211 = pnand %p209, %p210
      %p212 = pneg %p211
      // Predicated region
      $region9: #{tpu_custom_call.1} parent=5 // pred_check
        _
      $region10: #{tpu_custom_call.1} parent=5 // pred_check_branch
        %214 = sbr.rel (%p211) target = $region12
      $region11: #{tpu_custom_call.1} parent=5 // pred_region
        %s215 = ssub.s32 %s15, 1
        // Predicated region
        $region13: #{tpu_custom_call.1} parent=11 // pred_check
          %p216 = pneg %p115
        $region14: #{tpu_custom_call.1} parent=11 // pred_check_branch
          %218 = sbr.rel (%p216) target = $region16
        $region15: #{tpu_custom_call.1} parent=11 // pred_region
          _
        $region16: #{tpu_custom_call.1} parent=11 // pred_fallthru
          _
      $region12: #{tpu_custom_call.1} parent=5 // pred_fallthru
        _
      %p219 = scmp.lt.s32.totalorder %s15, 4
      // Predicated region
      $region17: #{tpu_custom_call.1} parent=5 // pred_check
        %p220 = pneg %p219
      $region18: #{tpu_custom_call.1} parent=5 // pred_check_branch
        %222 = sbr.rel (%p220) target = $region20
      $region19: #{tpu_custom_call.1} parent=5 // pred_region
        // Predicated region
        $region21: #{tpu_custom_call.1} parent=19 // pred_check
          %p223 = pneg %p58
        $region22: #{tpu_custom_call.1} parent=19 // pred_check_branch
          %225 = sbr.rel (%p223) target = $region24
        $region23: #{tpu_custom_call.1} parent=19 // pred_region
          %s226 = sadd.s32 %s23, %s24
          %s227 = smul.u32 16, %s226
          %p228 = scmp.lt.s32.totalorder %s22, 1
          %s229 = scalar_select %p228, %s22, 1
          %p230 = scmp.lt.s32.totalorder %s227, 47
          %s231 = scalar_select %p230, %s227, 47
          %s232 = smul.addr %s229, 48
          %s233 = sadd.s32 %s231, %s232
          %s234 = smul.addr %s233, 4
          %s235 = scalar_lea.vmem %s0, %s234
          %s236 = sadd.s32 %s23, %s24
          %s237 = smul.u32 16, %s236
        $region24: #{tpu_custom_call.1} parent=19 // pred_fallthru
          _
        // Predicated region
        $region25: #{tpu_custom_call.1} parent=19 // pred_check
          %p238 = pneg %p88
        $region26: #{tpu_custom_call.1} parent=19 // pred_check_branch
          %240 = sbr.rel (%p238) target = $region28
        $region27: #{tpu_custom_call.1} parent=19 // pred_region
          %s241 = sadd.s32 %s23, %s24
          %p242 = scmp.lt.s32.totalorder %s22, 1
          %s243 = scalar_select %p242, %s22, 1
          %p244 = scmp.lt.s32.totalorder %s241, 1
          %s245 = scalar_select %p244, %s241, 1
          %s246 = smul.addr %s243, 2
          %s247 = sadd.s32 %s245, %s246
          %s248 = smul.addr %s247, 4
          %s249 = scalar_lea.vmem %s1, %s248
          %s250 = sadd.s32 %s23, %s24
        $region28: #{tpu_custom_call.1} parent=19 // pred_fallthru
          _
      $region20: #{tpu_custom_call.1} parent=5 // pred_fallthru
        _
      %p251 = scmp.le.s32.totalorder 1, %s15
      %p252 = scmp.lt.s32.totalorder %s15, 5
      %p253 = pnand %p251, %p252
      %p254 = pneg %p253
      // Predicated region
      $region29: #{tpu_custom_call.1} parent=5 // pred_check
        _
      $region30: #{tpu_custom_call.1} parent=5 // pred_check_branch
        %256 = sbr.rel (%p253) target = $region32
      $region31: #{tpu_custom_call.1} parent=5 // pred_region
        %s257 = ssub.s32 %s15, 1
        %s258 = sadd.s32 %s26, %s27
        %s259 = smul.u32 16, %s258
        %p260 = scmp.lt.s32.totalorder %s25, 1
        %s261 = scalar_select %p260, %s25, 1
        %p262 = scmp.lt.s32.totalorder %s259, 47
        %s263 = scalar_select %p262, %s259, 47
        %s264 = smul.addr %s261, 48
        %s265 = sadd.s32 %s263, %s264
        %s266 = smul.addr %s265, 4
        %s267 = scalar_lea.vmem %s0, %s266
        %p268 = pneg %p64
        %p269 = pneg %p61
        %s270 = sadd.s32 %s26, %s27
        %p271 = scmp.lt.s32.totalorder %s25, 1
        %s272 = scalar_select %p271, %s25, 1
        %p273 = scmp.lt.s32.totalorder %s270, 1
        %s274 = scalar_select %p273, %s270, 1
        %s275 = smul.addr %s272, 2
        %s276 = sadd.s32 %s274, %s275
        %s277 = smul.addr %s276, 4
        %s278 = scalar_lea.vmem %s1, %s277
        %p279 = pneg %p94
        %p280 = pneg %p91
        %p281 = pneg %p115
        %p282 = pneg %p112
        %p283 = pneg %p145
        %p284 = pneg %p142
        %s285 = sand.u32 %s132, 1
        %s286 = scalar_lea.sflag [#allocation4], %s285
        %s287 = sand.u32 %s132, 1
        %s288 = smul.addr %s287, 256
        %s289 = scalar_lea.vmem [#allocation3], %s288
        %p290 = pneg %p173
        %p291 = pneg %p170
        %p292 = scmp.lt.s32.totalorder %s25, 1
        %s293 = scalar_select %p292, %s25, 1
        %p294 = scmp.lt.s32.totalorder %s26, 1
        %s295 = scalar_select %p294, %s26, 1
        %s296 = smul.addr %s295, 2
        %s297 = smul.addr %s293, 4
        %s298 = sadd.s32 %s296, %s297
        %s299 = smul.addr %s298, 8
        %s300 = scalar_lea.vmem %s4, %s299
        %p301 = pneg %p201
        %p302 = pneg %p198
        %p303 = scmp.lt.s32.totalorder %s25, 1
        %s304 = scalar_select %p303, %s25, 1
        %p305 = scmp.lt.s32.totalorder %s26, 1
        %s306 = scalar_select %p305, %s26, 1
        %s307 = smul.addr %s306, 2
        %s308 = smul.addr %s304, 4
        %s309 = sadd.s32 %s307, %s308
        %s310 = smul.addr %s309, 8
        %s311 = scalar_lea.vmem %s5, %s310
        %s312 = sadd.s32 %s26, %s27
        %s313 = smul.u32 16, %s312
        %p314 = scmp.lt.s32.totalorder %s25, 1
        %s315 = scalar_select %p314, %s25, 1
        %p316 = scmp.lt.s32.totalorder %s313, 47
        %s317 = scalar_select %p316, %s313, 47
        %s318 = smul.addr %s315, 48
        %s319 = sadd.s32 %s317, %s318
        %s320 = smul.addr %s319, 4
        %s321 = scalar_lea.vmem %s0, %s320
        %s322 = sadd.s32 %s26, %s27
        %s323 = smul.u32 16, %s322
        %s324 = sadd.s32 %s26, %s27
        %p325 = scmp.lt.s32.totalorder %s25, 1
        %s326 = scalar_select %p325, %s25, 1
        %p327 = scmp.lt.s32.totalorder %s324, 1
        %s328 = scalar_select %p327, %s324, 1
        %s329 = smul.addr %s326, 2
        %s330 = sadd.s32 %s328, %s329
        %s331 = smul.addr %s330, 4
        %s332 = scalar_lea.vmem %s1, %s331
        %s333 = sadd.s32 %s26, %s27
        %s334 = sadd.s32 %s26, %s27
        %s335 = smul.u32 16, %s334
        %p336 = scmp.lt.s32.totalorder %s25, 1
        %s337 = scalar_select %p336, %s25, 1
        %p338 = scmp.lt.s32.totalorder %s26, 1
        %s339 = scalar_select %p338, %s26, 1
        %s340 = smul.addr %s339, 2
        %s341 = smul.addr %s337, 4
        %s342 = sadd.s32 %s340, %s341
        %s343 = smul.addr %s342, 8
        %s344 = scalar_lea.vmem %s4, %s343
        %p345 = scmp.lt.s32.totalorder %s25, 1
        %s346 = scalar_select %p345, %s25, 1
        %p347 = scmp.lt.s32.totalorder %s26, 1
        %s348 = scalar_select %p347, %s26, 1
        %s349 = smul.addr %s348, 2
        %s350 = smul.addr %s346, 4
        %s351 = sadd.s32 %s349, %s350
        %s352 = smul.addr %s351, 8
        %s353 = scalar_lea.vmem %s5, %s352
        %s354 = sadd.s32 %s26, %s27
        %p355 = scmp.eq.s32.totalorder %s27, 0
        // Predicated region
        $region33: #{tpu_custom_call.1} parent=31 // pred_check
          %p356 = pneg %p355
        $region34: #{tpu_custom_call.1} parent=31 // pred_check_branch
          %358 = sbr.rel (%p356) target = $region36
        $region35: #{tpu_custom_call.1} parent=31 // pred_region
          %vm359 = vcmask 7168
          %360 = vst.msk [vmem:[%s344] sm:$0xff] %vm359, 0.0
          %361 = vst.msk [vmem:[%s344 + $0x8] sm:$0xff] %vm359, 0.0
          %362 = vst.msk [vmem:[%s353] sm:$0xff] %vm359, 0.0
          %363 = vst.msk [vmem:[%s353 + $0x8] sm:$0xff] %vm359, 0.0
        $region36: #{tpu_custom_call.1} parent=31 // pred_fallthru
          _
        %v364 = vld [vmem:[%s321] sm:$0x77]
        %v365 = vld [vmem:[%s321 + $0x8] sm:$0x77]
        %v366 = vld [vmem:[%s321 + $0x10] sm:$0x77]
        %v367 = vld [vmem:[%s321 + $0x18] sm:$0x77]
        %v368 = vld [vmem:[%s321 + $0x20] sm:$0x77]
        %v369 = vld [vmem:[%s321 + $0x28] sm:$0x77]
        %v370 = vld [vmem:[%s321 + $0x30] sm:$0x77]
        %v371 = vld [vmem:[%s321 + $0x38] sm:$0x77]
        %372 = vst [vmem:[#allocation2] sm:$0x77] %v364
        %373 = vst [vmem:[#allocation2 + $0x8] sm:$0x77] %v365
        %374 = vst [vmem:[#allocation2 + $0x10] sm:$0x77] %v366
        %375 = vst [vmem:[#allocation2 + $0x18] sm:$0x77] %v367
        %376 = vst [vmem:[#allocation2 + $0x20] sm:$0x77] %v368
        %377 = vst [vmem:[#allocation2 + $0x28] sm:$0x77] %v369
        %378 = vst [vmem:[#allocation2 + $0x30] sm:$0x77] %v370
        %379 = vst [vmem:[#allocation2 + $0x38] sm:$0x77] %v371
        %v380 = vld [vmem:[%s332] sm:$0x7]
        %381 = vst [vmem:[#allocation2 + $0x40] sm:$0x7] %v380
        loop: start=0, step=1, limit=8
        $region37: #{tpu_custom_call.1} parent=31 // loop_pre_header
          _
        $region38: #{tpu_custom_call.1} parent=31 // loop_header
          %s383 = sphi 0, %s387
          %p384 = scmp.ge.s32.totalorder %s383, 8
        $region39: #{tpu_custom_call.1} parent=31 // loop_header_branch
          %386 = sbr.rel (%p384) target = $region43
        $region40: #{tpu_custom_call.1} parent=31 // loop_body
          %s388 = smul.u32 %s383, 256
          %s389 = sshra.s32 %s388, 7
          %s390 = sand.u32 %s388, 127
          %s391 = smul.addr %s389, 4
          %s392 = scalar_lea.vmem [#allocation2], %s391
          %v393 = vld [vmem:[%s392] sm:$0x77]
          %v394 = vld [vmem:[%s392 + $0x8] sm:$0x7]
          %v396 = vperm.slane %v393, 0
          %v397 = vperm.slane %v393, 4
          %v400 = vperm.slane %v396, 0
          %v401 = vperm.slane %v397, 0
          %v402 = vld [vmem:[%s2] sm:$0xff]
          %v403 = vld [vmem:[%s2 + $0x8] sm:$0xff]
          %v404 = vld [vmem:[%s2 + $0x10] sm:$0xff]
          %v405 = vld [vmem:[%s2 + $0x18] sm:$0xff]
          %v406 = vmul.f32 %v402, %v400
          %v407 = vmul.f32 %v403, %v401
          %v408 = vmul.f32 %v404, %v400
          %v409 = vmul.f32 %v405, %v401
          %v410 = vadd.f32 %v406, 0.0
          %v411 = vadd.f32 %v407, 0.0
          %v412 = vadd.f32 %v408, 0.0
          %v413 = vadd.f32 %v409, 0.0
          %v414 = vperm.slane %v393, 1
          %v415 = vperm.slane %v393, 5
          %v418 = vperm.slane %v414, 1
          %v419 = vperm.slane %v415, 1
          %s420 = scalar_lea.vmem %s2, 32
          %v421 = vld [vmem:[%s420] sm:$0xff]
          %v422 = vld [vmem:[%s420 + $0x8] sm:$0xff]
          %v423 = vld [vmem:[%s420 + $0x10] sm:$0xff]
          %v424 = vld [vmem:[%s420 + $0x18] sm:$0xff]
          %v425 = vmul.f32 %v421, %v418
          %v426 = vmul.f32 %v422, %v419
          %v427 = vmul.f32 %v423, %v418
          %v428 = vmul.f32 %v424, %v419
          %v429 = vadd.f32 %v410, %v425
          %v430 = vadd.f32 %v411, %v426
          %v431 = vadd.f32 %v412, %v427
          %v432 = vadd.f32 %v413, %v428
          %v433 = vmul.f32 %v402, %v418
          %v434 = vmul.f32 %v403, %v419
          %v435 = vmul.f32 %v404, %v418
          %v436 = vmul.f32 %v405, %v419
          %v437 = vadd.f32 %v433, 0.0
          %v438 = vadd.f32 %v434, 0.0
          %v439 = vadd.f32 %v435, 0.0
          %v440 = vadd.f32 %v436, 0.0
          %v441 = vperm.slane %v393, 2
          %v442 = vperm.slane %v393, 6
          %v445 = vperm.slane %v441, 2
          %v446 = vperm.slane %v442, 2
          %s447 = scalar_lea.vmem %s2, 64
          %v448 = vld [vmem:[%s447] sm:$0xff]
          %v449 = vld [vmem:[%s447 + $0x8] sm:$0xff]
          %v450 = vld [vmem:[%s447 + $0x10] sm:$0xff]
          %v451 = vld [vmem:[%s447 + $0x18] sm:$0xff]
          %v452 = vmul.f32 %v448, %v445
          %v453 = vmul.f32 %v449, %v446
          %v454 = vmul.f32 %v450, %v445
          %v455 = vmul.f32 %v451, %v446
          %v456 = vadd.f32 %v429, %v452
          %v457 = vadd.f32 %v430, %v453
          %v458 = vadd.f32 %v431, %v454
          %v459 = vadd.f32 %v432, %v455
          %v460 = vmul.f32 %v421, %v445
          %v461 = vmul.f32 %v422, %v446
          %v462 = vmul.f32 %v423, %v445
          %v463 = vmul.f32 %v424, %v446
          %v464 = vadd.f32 %v437, %v460
          %v465 = vadd.f32 %v438, %v461
          %v466 = vadd.f32 %v439, %v462
          %v467 = vadd.f32 %v440, %v463
          %v468 = vmul.f32 %v402, %v445
          %v469 = vmul.f32 %v403, %v446
          %v470 = vmul.f32 %v404, %v445
          %v471 = vmul.f32 %v405, %v446
          %v472 = vadd.f32 %v468, 0.0
          %v473 = vadd.f32 %v469, 0.0
          %v474 = vadd.f32 %v470, 0.0
          %v475 = vadd.f32 %v471, 0.0
          %477 = vst [vmem:[#allocation1] ss:$2 sm:$0xff] %v393
          %s478 = scalar_lea.vmem [#allocation1], 16
          %479 = vst [vmem:[%s478] ss:$2 sm:$0xff] %v394
          %v480 = vld.sshfl [vmem:[#allocation1] sm:$0xff pattern:$0x75316420]
          %v481 = vld.sshfl [vmem:[#allocation1 + $0x8] sm:$0xff pattern:$0x75316420]
          %v482 = vld.sshfl [vmem:[#allocation1 + $0x10] sm:$0xff pattern:$0x75316420]
          %486 = vrot.lane.b32.xlu0 %v480, 127
          %v487 = vpop.permute.xlu0 %486
          %488 = vrot.lane.b32.xlu0 %v481, 127
          %v489 = vpop.permute.xlu0 %488
          %490 = vrot.lane.b32.xlu0 %v482, 127
          %v491 = vpop.permute.xlu0 %490
          %v492 = vlaneseq
          %v493 = vand.u32 %v492, 127
          %vm494 = vcmp.lt.s32.totalorder %v493, 127
          %v495 = vsel %vm494, %v489, %v491
          %v496 = vsel %vm494, %v487, %v489
          %v497 = vperm.slane %v496, 0
          %v498 = vperm.slane %v495, 0
          %s499 = scalar_lea.vmem %s2, 96
          %v500 = vld [vmem:[%s499] sm:$0xff]
          %v501 = vld [vmem:[%s499 + $0x8] sm:$0xff]
          %v502 = vld [vmem:[%s499 + $0x10] sm:$0xff]
          %v503 = vld [vmem:[%s499 + $0x18] sm:$0xff]
          %v504 = vmul.f32 %v500, %v497
          %v505 = vmul.f32 %v501, %v498
          %v506 = vmul.f32 %v502, %v497
          %v507 = vmul.f32 %v503, %v498
          %v508 = vadd.f32 %v456, %v504
          %v509 = vadd.f32 %v457, %v505
          %v510 = vadd.f32 %v458, %v506
          %v511 = vadd.f32 %v459, %v507
          %v512 = vmul.f32 %v448, %v497
          %v513 = vmul.f32 %v449, %v498
          %v514 = vmul.f32 %v450, %v497
          %v515 = vmul.f32 %v451, %v498
          %v516 = vadd.f32 %v464, %v512
          %v517 = vadd.f32 %v465, %v513
          %v518 = vadd.f32 %v466, %v514
          %v519 = vadd.f32 %v467, %v515
          %v520 = vmul.f32 %v421, %v497
          %v521 = vmul.f32 %v422, %v498
          %v522 = vmul.f32 %v423, %v497
          %v523 = vmul.f32 %v424, %v498
          %v524 = vadd.f32 %v472, %v520
          %v525 = vadd.f32 %v473, %v521
          %v526 = vadd.f32 %v474, %v522
          %v527 = vadd.f32 %v475, %v523
          %v528 = vperm.slane %v496, 1
          %v529 = vperm.slane %v495, 1
          %s530 = scalar_lea.vmem %s2, 128
          %v531 = vld [vmem:[%s530] sm:$0xff]
          %v532 = vld [vmem:[%s530 + $0x8] sm:$0xff]
          %v533 = vld [vmem:[%s530 + $0x10] sm:$0xff]
          %v534 = vld [vmem:[%s530 + $0x18] sm:$0xff]
          %v535 = vmul.f32 %v531, %v528
          %v536 = vmul.f32 %v532, %v529
          %v537 = vmul.f32 %v533, %v528
          %v538 = vmul.f32 %v534, %v529
          %v539 = vadd.f32 %v508, %v535
          %v540 = vadd.f32 %v509, %v536
          %v541 = vadd.f32 %v510, %v537
          %v542 = vadd.f32 %v511, %v538
          %v543 = vmul.f32 %v500, %v528
          %v544 = vmul.f32 %v501, %v529
          %v545 = vmul.f32 %v502, %v528
          %v546 = vmul.f32 %v503, %v529
          %v547 = vadd.f32 %v516, %v543
          %v548 = vadd.f32 %v517, %v544
          %v549 = vadd.f32 %v518, %v545
          %v550 = vadd.f32 %v519, %v546
          %v551 = vmul.f32 %v448, %v528
          %v552 = vmul.f32 %v449, %v529
          %v553 = vmul.f32 %v450, %v528
          %v554 = vmul.f32 %v451, %v529
          %v555 = vadd.f32 %v524, %v551
          %v556 = vadd.f32 %v525, %v552
          %v557 = vadd.f32 %v526, %v553
          %v558 = vadd.f32 %v527, %v554
          %v559 = vperm.slane %v496, 2
          %v560 = vperm.slane %v495, 2
          %s561 = scalar_lea.vmem %s2, 160
          %v562 = vld [vmem:[%s561] sm:$0xff]
          %v563 = vld [vmem:[%s561 + $0x8] sm:$0xff]
          %v564 = vld [vmem:[%s561 + $0x10] sm:$0xff]
          %v565 = vld [vmem:[%s561 + $0x18] sm:$0xff]
          %v566 = vmul.f32 %v562, %v559
          %v567 = vmul.f32 %v563, %v560
          %v568 = vmul.f32 %v564, %v559
          %v569 = vmul.f32 %v565, %v560
          %v570 = vadd.f32 %v539, %v566
          %v571 = vadd.f32 %v540, %v567
          %v572 = vadd.f32 %v541, %v568
          %v573 = vadd.f32 %v542, %v569
          %v574 = vmul.f32 %v531, %v559
          %v575 = vmul.f32 %v532, %v560
          %v576 = vmul.f32 %v533, %v559
          %v577 = vmul.f32 %v534, %v560
          %v578 = vadd.f32 %v547, %v574
          %v579 = vadd.f32 %v548, %v575
          %v580 = vadd.f32 %v549, %v576
          %v581 = vadd.f32 %v550, %v577
          %v582 = vmul.f32 %v500, %v559
          %v583 = vmul.f32 %v501, %v560
          %v584 = vmul.f32 %v502, %v559
          %v585 = vmul.f32 %v503, %v560
          %v586 = vadd.f32 %v555, %v582
          %v587 = vadd.f32 %v556, %v583
          %v588 = vadd.f32 %v557, %v584
          %v589 = vadd.f32 %v558, %v585
          %590 = vst [vmem:[#allocation1] ss:$2 sm:$0xff] %v393
          %s591 = scalar_lea.vmem [#allocation1], 16
          %592 = vst [vmem:[%s591] ss:$2 sm:$0xff] %v394
          %v593 = vld.sshfl [vmem:[#allocation1] sm:$0xff pattern:$0x75316420]
          %v594 = vld.sshfl [vmem:[#allocation1 + $0x8] sm:$0xff pattern:$0x75316420]
          %v595 = vld.sshfl [vmem:[#allocation1 + $0x10] sm:$0xff pattern:$0x75316420]
          %599 = vrot.lane.b32.xlu0 %v593, 126
          %v600 = vpop.permute.xlu0 %599
          %601 = vrot.lane.b32.xlu0 %v594, 126
          %v602 = vpop.permute.xlu0 %601
          %603 = vrot.lane.b32.xlu0 %v595, 126
          %v604 = vpop.permute.xlu0 %603
          %vm605 = vcmp.lt.s32.totalorder %v493, 126
          %v606 = vsel %vm605, %v602, %v604
          %v607 = vsel %vm605, %v600, %v602
          %v608 = vperm.slane %v607, 0
          %v609 = vperm.slane %v606, 0
          %s610 = scalar_lea.vmem %s2, 192
          %v611 = vld [vmem:[%s610] sm:$0xff]
          %v612 = vld [vmem:[%s610 + $0x8] sm:$0xff]
          %v613 = vld [vmem:[%s610 + $0x10] sm:$0xff]
          %v614 = vld [vmem:[%s610 + $0x18] sm:$0xff]
          %v615 = vmul.f32 %v611, %v608
          %v616 = vmul.f32 %v612, %v609
          %v617 = vmul.f32 %v613, %v608
          %v618 = vmul.f32 %v614, %v609
          %v619 = vadd.f32 %v570, %v615
          %v620 = vadd.f32 %v571, %v616
          %v621 = vadd.f32 %v572, %v617
          %v622 = vadd.f32 %v573, %v618
          %v623 = vmul.f32 %v562, %v608
          %v624 = vmul.f32 %v563, %v609
          %v625 = vmul.f32 %v564, %v608
          %v626 = vmul.f32 %v565, %v609
          %v627 = vadd.f32 %v578, %v623
          %v628 = vadd.f32 %v579, %v624
          %v629 = vadd.f32 %v580, %v625
          %v630 = vadd.f32 %v581, %v626
          %v631 = vmul.f32 %v531, %v608
          %v632 = vmul.f32 %v532, %v609
          %v633 = vmul.f32 %v533, %v608
          %v634 = vmul.f32 %v534, %v609
          %v635 = vadd.f32 %v586, %v631
          %v636 = vadd.f32 %v587, %v632
          %v637 = vadd.f32 %v588, %v633
          %v638 = vadd.f32 %v589, %v634
          %v639 = vperm.slane %v607, 1
          %v640 = vperm.slane %v606, 1
          %s641 = scalar_lea.vmem %s2, 224
          %v642 = vld [vmem:[%s641] sm:$0xff]
          %v643 = vld [vmem:[%s641 + $0x8] sm:$0xff]
          %v644 = vld [vmem:[%s641 + $0x10] sm:$0xff]
          %v645 = vld [vmem:[%s641 + $0x18] sm:$0xff]
          %v646 = vmul.f32 %v642, %v639
          %v647 = vmul.f32 %v643, %v640
          %v648 = vmul.f32 %v644, %v639
          %v649 = vmul.f32 %v645, %v640
          %v650 = vadd.f32 %v619, %v646
          %v651 = vadd.f32 %v620, %v647
          %v652 = vadd.f32 %v621, %v648
          %v653 = vadd.f32 %v622, %v649
          %v654 = vmul.f32 %v611, %v639
          %v655 = vmul.f32 %v612, %v640
          %v656 = vmul.f32 %v613, %v639
          %v657 = vmul.f32 %v614, %v640
          %v658 = vadd.f32 %v627, %v654
          %v659 = vadd.f32 %v628, %v655
          %v660 = vadd.f32 %v629, %v656
          %v661 = vadd.f32 %v630, %v657
          %v662 = vmul.f32 %v562, %v639
          %v663 = vmul.f32 %v563, %v640
          %v664 = vmul.f32 %v564, %v639
          %v665 = vmul.f32 %v565, %v640
          %v666 = vadd.f32 %v635, %v662
          %v667 = vadd.f32 %v636, %v663
          %v668 = vadd.f32 %v637, %v664
          %v669 = vadd.f32 %v638, %v665
          %v670 = vperm.slane %v607, 2
          %v671 = vperm.slane %v606, 2
          %s672 = scalar_lea.vmem %s2, 256
          %v673 = vld [vmem:[%s672] sm:$0xff]
          %v674 = vld [vmem:[%s672 + $0x8] sm:$0xff]
          %v675 = vld [vmem:[%s672 + $0x10] sm:$0xff]
          %v676 = vld [vmem:[%s672 + $0x18] sm:$0xff]
          %v677 = vmul.f32 %v673, %v670
          %v678 = vmul.f32 %v674, %v671
          %v679 = vmul.f32 %v675, %v670
          %v680 = vmul.f32 %v676, %v671
          %v681 = vadd.f32 %v650, %v677
          %v682 = vadd.f32 %v651, %v678
          %v683 = vadd.f32 %v652, %v679
          %v684 = vadd.f32 %v653, %v680
          %v685 = vmul.f32 %v642, %v670
          %v686 = vmul.f32 %v643, %v671
          %v687 = vmul.f32 %v644, %v670
          %v688 = vmul.f32 %v645, %v671
          %v689 = vadd.f32 %v658, %v685
          %v690 = vadd.f32 %v659, %v686
          %v691 = vadd.f32 %v660, %v687
          %v692 = vadd.f32 %v661, %v688
          %v693 = vmul.f32 %v611, %v670
          %v694 = vmul.f32 %v612, %v671
          %v695 = vmul.f32 %v613, %v670
          %v696 = vmul.f32 %v614, %v671
          %v697 = vadd.f32 %v666, %v693
          %v698 = vadd.f32 %v667, %v694
          %v699 = vadd.f32 %v668, %v695
          %v700 = vadd.f32 %v669, %v696
          %701 = vst [vmem:[#allocation1] ss:$2 sm:$0xff] %v393
          %s702 = scalar_lea.vmem [#allocation1], 16
          %703 = vst [vmem:[%s702] ss:$2 sm:$0xff] %v394
          %v704 = vld.sshfl [vmem:[#allocation1] sm:$0xff pattern:$0x75316420]
          %v705 = vld.sshfl [vmem:[#allocation1 + $0x8] sm:$0xff pattern:$0x75316420]
          %v706 = vld.sshfl [vmem:[#allocation1 + $0x10] sm:$0xff pattern:$0x75316420]
          %710 = vrot.lane.b32.xlu0 %v704, 125
          %v711 = vpop.permute.xlu0 %710
          %712 = vrot.lane.b32.xlu0 %v705, 125
          %v713 = vpop.permute.xlu0 %712
          %714 = vrot.lane.b32.xlu0 %v706, 125
          %v715 = vpop.permute.xlu0 %714
          %vm716 = vcmp.lt.s32.totalorder %v493, 125
          %v717 = vsel %vm716, %v713, %v715
          %v718 = vsel %vm716, %v711, %v713
          %v719 = vperm.slane %v718, 0
          %v720 = vperm.slane %v717, 0
          %s721 = scalar_lea.vmem %s2, 288
          %v722 = vld [vmem:[%s721] sm:$0xff]
          %v723 = vld [vmem:[%s721 + $0x8] sm:$0xff]
          %v724 = vld [vmem:[%s721 + $0x10] sm:$0xff]
          %v725 = vld [vmem:[%s721 + $0x18] sm:$0xff]
          %v726 = vmul.f32 %v722, %v719
          %v727 = vmul.f32 %v723, %v720
          %v728 = vmul.f32 %v724, %v719
          %v729 = vmul.f32 %v725, %v720
          %v730 = vadd.f32 %v681, %v726
          %v731 = vadd.f32 %v682, %v727
          %v732 = vadd.f32 %v683, %v728
          %v733 = vadd.f32 %v684, %v729
          %v734 = vmul.f32 %v673, %v719
          %v735 = vmul.f32 %v674, %v720
          %v736 = vmul.f32 %v675, %v719
          %v737 = vmul.f32 %v676, %v720
          %v738 = vadd.f32 %v689, %v734
          %v739 = vadd.f32 %v690, %v735
          %v740 = vadd.f32 %v691, %v736
          %v741 = vadd.f32 %v692, %v737
          %v742 = vmul.f32 %v642, %v719
          %v743 = vmul.f32 %v643, %v720
          %v744 = vmul.f32 %v644, %v719
          %v745 = vmul.f32 %v645, %v720
          %v746 = vadd.f32 %v697, %v742
          %v747 = vadd.f32 %v698, %v743
          %v748 = vadd.f32 %v699, %v744
          %v749 = vadd.f32 %v700, %v745
          %v750 = vperm.slane %v718, 1
          %v751 = vperm.slane %v717, 1
          %s752 = scalar_lea.vmem %s2, 320
          %v753 = vld [vmem:[%s752] sm:$0xff]
          %v754 = vld [vmem:[%s752 + $0x8] sm:$0xff]
          %v755 = vld [vmem:[%s752 + $0x10] sm:$0xff]
          %v756 = vld [vmem:[%s752 + $0x18] sm:$0xff]
          %v757 = vmul.f32 %v753, %v750
          %v758 = vmul.f32 %v754, %v751
          %v759 = vmul.f32 %v755, %v750
          %v760 = vmul.f32 %v756, %v751
          %v761 = vadd.f32 %v730, %v757
          %v762 = vadd.f32 %v731, %v758
          %v763 = vadd.f32 %v732, %v759
          %v764 = vadd.f32 %v733, %v760
          %v765 = vmul.f32 %v722, %v750
          %v766 = vmul.f32 %v723, %v751
          %v767 = vmul.f32 %v724, %v750
          %v768 = vmul.f32 %v725, %v751
          %v769 = vadd.f32 %v738, %v765
          %v770 = vadd.f32 %v739, %v766
          %v771 = vadd.f32 %v740, %v767
          %v772 = vadd.f32 %v741, %v768
          %v773 = vmul.f32 %v673, %v750
          %v774 = vmul.f32 %v674, %v751
          %v775 = vmul.f32 %v675, %v750
          %v776 = vmul.f32 %v676, %v751
          %v777 = vadd.f32 %v746, %v773
          %v778 = vadd.f32 %v747, %v774
          %v779 = vadd.f32 %v748, %v775
          %v780 = vadd.f32 %v749, %v776
          %v781 = vperm.slane %v718, 2
          %v782 = vperm.slane %v717, 2
          %s783 = scalar_lea.vmem %s2, 352
          %v784 = vld [vmem:[%s783] sm:$0xff]
          %v785 = vld [vmem:[%s783 + $0x8] sm:$0xff]
          %v786 = vld [vmem:[%s783 + $0x10] sm:$0xff]
          %v787 = vld [vmem:[%s783 + $0x18] sm:$0xff]
          %v788 = vmul.f32 %v784, %v781
          %v789 = vmul.f32 %v785, %v782
          %v790 = vmul.f32 %v786, %v781
          %v791 = vmul.f32 %v787, %v782
          %v792 = vadd.f32 %v761, %v788
          %v793 = vadd.f32 %v762, %v789
          %v794 = vadd.f32 %v763, %v790
          %v795 = vadd.f32 %v764, %v791
          %v796 = vmul.f32 %v753, %v781
          %v797 = vmul.f32 %v754, %v782
          %v798 = vmul.f32 %v755, %v781
          %v799 = vmul.f32 %v756, %v782
          %v800 = vadd.f32 %v769, %v796
          %v801 = vadd.f32 %v770, %v797
          %v802 = vadd.f32 %v771, %v798
          %v803 = vadd.f32 %v772, %v799
          %v804 = vmul.f32 %v722, %v781
          %v805 = vmul.f32 %v723, %v782
          %v806 = vmul.f32 %v724, %v781
          %v807 = vmul.f32 %v725, %v782
          %v808 = vadd.f32 %v777, %v804
          %v809 = vadd.f32 %v778, %v805
          %v810 = vadd.f32 %v779, %v806
          %v811 = vadd.f32 %v780, %v807
          %812 = vst [vmem:[#allocation1] ss:$2 sm:$0xff] %v393
          %s813 = scalar_lea.vmem [#allocation1], 16
          %814 = vst [vmem:[%s813] ss:$2 sm:$0xff] %v394
          %v815 = vld.sshfl [vmem:[#allocation1] sm:$0xff pattern:$0x75316420]
          %v816 = vld.sshfl [vmem:[#allocation1 + $0x8] sm:$0xff pattern:$0x75316420]
          %v817 = vld.sshfl [vmem:[#allocation1 + $0x10] sm:$0xff pattern:$0x75316420]
          %821 = vrot.lane.b32.xlu0 %v815, 124
          %v822 = vpop.permute.xlu0 %821
          %823 = vrot.lane.b32.xlu0 %v816, 124
          %v824 = vpop.permute.xlu0 %823
          %825 = vrot.lane.b32.xlu0 %v817, 124
          %v826 = vpop.permute.xlu0 %825
          %vm827 = vcmp.lt.s32.totalorder %v493, 124
          %v828 = vsel %vm827, %v824, %v826
          %v829 = vsel %vm827, %v822, %v824
          %v830 = vperm.slane %v829, 0
          %v831 = vperm.slane %v828, 0
          %s832 = scalar_lea.vmem %s2, 384
          %v833 = vld [vmem:[%s832] sm:$0xff]
          %v834 = vld [vmem:[%s832 + $0x8] sm:$0xff]
          %v835 = vld [vmem:[%s832 + $0x10] sm:$0xff]
          %v836 = vld [vmem:[%s832 + $0x18] sm:$0xff]
          %v837 = vmul.f32 %v833, %v830
          %v838 = vmul.f32 %v834, %v831
          %v839 = vmul.f32 %v835, %v830
          %v840 = vmul.f32 %v836, %v831
          %v841 = vadd.f32 %v792, %v837
          %v842 = vadd.f32 %v793, %v838
          %v843 = vadd.f32 %v794, %v839
          %v844 = vadd.f32 %v795, %v840
          %v845 = vmul.f32 %v784, %v830
          %v846 = vmul.f32 %v785, %v831
          %v847 = vmul.f32 %v786, %v830
          %v848 = vmul.f32 %v787, %v831
          %v849 = vadd.f32 %v800, %v845
          %v850 = vadd.f32 %v801, %v846
          %v851 = vadd.f32 %v802, %v847
          %v852 = vadd.f32 %v803, %v848
          %v853 = vmul.f32 %v753, %v830
          %v854 = vmul.f32 %v754, %v831
          %v855 = vmul.f32 %v755, %v830
          %v856 = vmul.f32 %v756, %v831
          %v857 = vadd.f32 %v808, %v853
          %v858 = vadd.f32 %v809, %v854
          %v859 = vadd.f32 %v810, %v855
          %v860 = vadd.f32 %v811, %v856
          %v861 = vperm.slane %v829, 1
          %v862 = vperm.slane %v828, 1
          %s863 = scalar_lea.vmem %s2, 416
          %v864 = vld [vmem:[%s863] sm:$0xff]
          %v865 = vld [vmem:[%s863 + $0x8] sm:$0xff]
          %v866 = vld [vmem:[%s863 + $0x10] sm:$0xff]
          %v867 = vld [vmem:[%s863 + $0x18] sm:$0xff]
          %v868 = vmul.f32 %v864, %v861
          %v869 = vmul.f32 %v865, %v862
          %v870 = vmul.f32 %v866, %v861
          %v871 = vmul.f32 %v867, %v862
          %v872 = vadd.f32 %v841, %v868
          %v873 = vadd.f32 %v842, %v869
          %v874 = vadd.f32 %v843, %v870
          %v875 = vadd.f32 %v844, %v871
          %v876 = vmul.f32 %v833, %v861
          %v877 = vmul.f32 %v834, %v862
          %v878 = vmul.f32 %v835, %v861
          %v879 = vmul.f32 %v836, %v862
          %v880 = vadd.f32 %v849, %v876
          %v881 = vadd.f32 %v850, %v877
          %v882 = vadd.f32 %v851, %v878
          %v883 = vadd.f32 %v852, %v879
          %v884 = vmul.f32 %v784, %v861
          %v885 = vmul.f32 %v785, %v862
          %v886 = vmul.f32 %v786, %v861
          %v887 = vmul.f32 %v787, %v862
          %v888 = vadd.f32 %v857, %v884
          %v889 = vadd.f32 %v858, %v885
          %v890 = vadd.f32 %v859, %v886
          %v891 = vadd.f32 %v860, %v887
          %v892 = vperm.slane %v829, 2
          %v893 = vperm.slane %v828, 2
          %s894 = scalar_lea.vmem %s2, 448
          %v895 = vld [vmem:[%s894] sm:$0xff]
          %v896 = vld [vmem:[%s894 + $0x8] sm:$0xff]
          %v897 = vld [vmem:[%s894 + $0x10] sm:$0xff]
          %v898 = vld [vmem:[%s894 + $0x18] sm:$0xff]
          %v899 = vmul.f32 %v895, %v892
          %v900 = vmul.f32 %v896, %v893
          %v901 = vmul.f32 %v897, %v892
          %v902 = vmul.f32 %v898, %v893
          %v903 = vadd.f32 %v872, %v899
          %v904 = vadd.f32 %v873, %v900
          %v905 = vadd.f32 %v874, %v901
          %v906 = vadd.f32 %v875, %v902
          %v907 = vmul.f32 %v864, %v892
          %v908 = vmul.f32 %v865, %v893
          %v909 = vmul.f32 %v866, %v892
          %v910 = vmul.f32 %v867, %v893
          %v911 = vadd.f32 %v880, %v907
          %v912 = vadd.f32 %v881, %v908
          %v913 = vadd.f32 %v882, %v909
          %v914 = vadd.f32 %v883, %v910
          %v915 = vmul.f32 %v833, %v892
          %v916 = vmul.f32 %v834, %v893
          %v917 = vmul.f32 %v835, %v892
          %v918 = vmul.f32 %v836, %v893
          %v919 = vadd.f32 %v888, %v915
          %v920 = vadd.f32 %v889, %v916
          %v921 = vadd.f32 %v890, %v917
          %v922 = vadd.f32 %v891, %v918
          %923 = vst [vmem:[#allocation1] ss:$2 sm:$0xff] %v393
          %s924 = scalar_lea.vmem [#allocation1], 16
          %925 = vst [vmem:[%s924] ss:$2 sm:$0xff] %v394
          %v926 = vld.sshfl [vmem:[#allocation1] sm:$0xff pattern:$0x75316420]
          %v927 = vld.sshfl [vmem:[#allocation1 + $0x8] sm:$0xff pattern:$0x75316420]
          %v928 = vld.sshfl [vmem:[#allocation1 + $0x10] sm:$0xff pattern:$0x75316420]
          %932 = vrot.lane.b32.xlu0 %v926, 123
          %v933 = vpop.permute.xlu0 %932
          %934 = vrot.lane.b32.xlu0 %v927, 123
          %v935 = vpop.permute.xlu0 %934
          %936 = vrot.lane.b32.xlu0 %v928, 123
          %v937 = vpop.permute.xlu0 %936
          %vm938 = vcmp.lt.s32.totalorder %v493, 123
          %v939 = vsel %vm938, %v935, %v937
          %v940 = vsel %vm938, %v933, %v935
          %v941 = vperm.slane %v940, 0
          %v942 = vperm.slane %v939, 0
          %s943 = scalar_lea.vmem %s2, 480
          %v944 = vld [vmem:[%s943] sm:$0xff]
          %v945 = vld [vmem:[%s943 + $0x8] sm:$0xff]
          %v946 = vld [vmem:[%s943 + $0x10] sm:$0xff]
          %v947 = vld [vmem:[%s943 + $0x18] sm:$0xff]
          %v948 = vmul.f32 %v944, %v941
          %v949 = vmul.f32 %v945, %v942
          %v950 = vmul.f32 %v946, %v941
          %v951 = vmul.f32 %v947, %v942
          %v952 = vadd.f32 %v903, %v948
          %v953 = vadd.f32 %v904, %v949
          %v954 = vadd.f32 %v905, %v950
          %v955 = vadd.f32 %v906, %v951
          %v956 = vmul.f32 %v895, %v941
          %v957 = vmul.f32 %v896, %v942
          %v958 = vmul.f32 %v897, %v941
          %v959 = vmul.f32 %v898, %v942
          %v960 = vadd.f32 %v911, %v956
          %v961 = vadd.f32 %v912, %v957
          %v962 = vadd.f32 %v913, %v958
          %v963 = vadd.f32 %v914, %v959
          %v964 = vmul.f32 %v864, %v941
          %v965 = vmul.f32 %v865, %v942
          %v966 = vmul.f32 %v866, %v941
          %v967 = vmul.f32 %v867, %v942
          %v968 = vadd.f32 %v919, %v964
          %v969 = vadd.f32 %v920, %v965
          %v970 = vadd.f32 %v921, %v966
          %v971 = vadd.f32 %v922, %v967
          %v972 = vperm.slane %v940, 1
          %v973 = vperm.slane %v939, 1
          %s974 = scalar_lea.vmem %s2, 512
          %v975 = vld [vmem:[%s974] sm:$0xff]
          %v976 = vld [vmem:[%s974 + $0x8] sm:$0xff]
          %v977 = vld [vmem:[%s974 + $0x10] sm:$0xff]
          %v978 = vld [vmem:[%s974 + $0x18] sm:$0xff]
          %v979 = vmul.f32 %v975, %v972
          %v980 = vmul.f32 %v976, %v973
          %v981 = vmul.f32 %v977, %v972
          %v982 = vmul.f32 %v978, %v973
          %v983 = vadd.f32 %v952, %v979
          %v984 = vadd.f32 %v953, %v980
          %v985 = vadd.f32 %v954, %v981
          %v986 = vadd.f32 %v955, %v982
          %v987 = vmul.f32 %v944, %v972
          %v988 = vmul.f32 %v945, %v973
          %v989 = vmul.f32 %v946, %v972
          %v990 = vmul.f32 %v947, %v973
          %v991 = vadd.f32 %v960, %v987
          %v992 = vadd.f32 %v961, %v988
          %v993 = vadd.f32 %v962, %v989
          %v994 = vadd.f32 %v963, %v990
          %v995 = vmul.f32 %v895, %v972
          %v996 = vmul.f32 %v896, %v973
          %v997 = vmul.f32 %v897, %v972
          %v998 = vmul.f32 %v898, %v973
          %v999 = vadd.f32 %v968, %v995
          %v1000 = vadd.f32 %v969, %v996
          %v1001 = vadd.f32 %v970, %v997
          %v1002 = vadd.f32 %v971, %v998
          %v1003 = vperm.slane %v940, 2
          %v1004 = vperm.slane %v939, 2
          %v1005 = vmul.f32 %v975, %v1003
          %v1006 = vmul.f32 %v976, %v1004
          %v1007 = vmul.f32 %v977, %v1003
          %v1008 = vmul.f32 %v978, %v1004
          %v1009 = vadd.f32 %v991, %v1005
          %v1010 = vadd.f32 %v992, %v1006
          %v1011 = vadd.f32 %v993, %v1007
          %v1012 = vadd.f32 %v994, %v1008
          %v1013 = vmul.f32 %v944, %v1003
          %v1014 = vmul.f32 %v945, %v1004
          %v1015 = vmul.f32 %v946, %v1003
          %v1016 = vmul.f32 %v947, %v1004
          %v1017 = vadd.f32 %v999, %v1013
          %v1018 = vadd.f32 %v1000, %v1014
          %v1019 = vadd.f32 %v1001, %v1015
          %v1020 = vadd.f32 %v1002, %v1016
          %1021 = vst [vmem:[#allocation1] ss:$2 sm:$0xff] %v393
          %s1022 = scalar_lea.vmem [#allocation1], 16
          %1023 = vst [vmem:[%s1022] ss:$2 sm:$0xff] %v394
          %v1024 = vld.sshfl [vmem:[#allocation1] sm:$0xff pattern:$0x75316420]
          %v1025 = vld.sshfl [vmem:[#allocation1 + $0x8] sm:$0xff pattern:$0x75316420]
          %v1026 = vld.sshfl [vmem:[#allocation1 + $0x10] sm:$0xff pattern:$0x75316420]
          %1030 = vrot.lane.b32.xlu0 %v1024, 122
          %v1031 = vpop.permute.xlu0 %1030
          %1032 = vrot.lane.b32.xlu0 %v1025, 122
          %v1033 = vpop.permute.xlu0 %1032
          %1034 = vrot.lane.b32.xlu0 %v1026, 122
          %v1035 = vpop.permute.xlu0 %1034
          %vm1036 = vcmp.lt.s32.totalorder %v493, 122
          %v1037 = vsel %vm1036, %v1033, %v1035
          %v1038 = vsel %vm1036, %v1031, %v1033
          %v1039 = vperm.slane %v1038, 0
          %v1040 = vperm.slane %v1037, 0
          %v1041 = vmul.f32 %v975, %v1039
          %v1042 = vmul.f32 %v976, %v1040
          %v1043 = vmul.f32 %v977, %v1039
          %v1044 = vmul.f32 %v978, %v1040
          %v1045 = vadd.f32 %v1017, %v1041
          %v1046 = vadd.f32 %v1018, %v1042
          %v1047 = vadd.f32 %v1019, %v1043
          %v1048 = vadd.f32 %v1020, %v1044
          %v1049 = vand.u32 2147483647, %v983
          %v1050 = vand.u32 2147483647, %v984
          %v1051 = vand.u32 2147483647, %v985
          %v1052 = vand.u32 2147483647, %v986
          %v1053 = vand.u32 2147483647, %v1009
          %v1054 = vand.u32 2147483647, %v1010
          %v1055 = vand.u32 2147483647, %v1011
          %v1056 = vand.u32 2147483647, %v1012
          %v1057 = vand.u32 2147483647, %v1045
          %v1058 = vand.u32 2147483647, %v1046
          %v1059 = vand.u32 2147483647, %v1047
          %v1060 = vand.u32 2147483647, %v1048
          %v1061 = vmax.f32 %v1049, %v1053
          %v1062 = vmax.f32 %v1050, %v1054
          %v1063 = vmax.f32 %v1051, %v1055
          %v1064 = vmax.f32 %v1052, %v1056
          %v1065 = vmax.f32 %v1061, %v1057
          %v1066 = vmax.f32 %v1062, %v1058
          %v1067 = vmax.f32 %v1063, %v1059
          %v1068 = vmax.f32 %v1064, %v1060
          %s1069 = smul.addr %s389, 8
          %s1070 = scalar_lea.vmem %s289, %s1069 [#allocation3]
          %1071 = vst [vmem:[%s1070] sm:$0xff] %v1065
          %1072 = vst [vmem:[%s1070 + $0x8] sm:$0xff] %v1066
          %1073 = vst [vmem:[%s1070 + $0x80] sm:$0xff] %v1067
          %1074 = vst [vmem:[%s1070 + $0x88] sm:$0xff] %v1068
          %s1075 = smul.u32 %s354, 2048
          %s1076 = sadd.s32 %s1075, %s388
          %s1077 = sadd.s32 %s1076, 256
          %p1078 = scmp.le.s32.totalorder %s1077, 2661
          // Predicated region
          $region44: #{tpu_custom_call.1} parent=40 // pred_check
            %p1079 = pneg %p1078
          $region45: #{tpu_custom_call.1} parent=40 // pred_check_branch
            %1081 = sbr.rel (%p1079) target = $region47
          $region46: #{tpu_custom_call.1} parent=40 // pred_region
            %v1082 = vld [vmem:[%s344] sm:$0xff]
            %v1083 = vld [vmem:[%s344 + $0x8] sm:$0xff]
            %v1084 = vadd.f32 %v1065, %v1066
            %1085 = vadd.xlane.f32.xlu0 %v1084
            %v1086 = vpop.xlane.xlu0 %1085
            %v1087 = vadd.f32 %v1067, %v1068
            %1088 = vadd.xlane.f32.xlu0 %v1087
            %v1089 = vpop.xlane.xlu0 %1088
            %v1090 = vadd.f32 %v1082, %v1086
            %v1091 = vadd.f32 %v1083, %v1089
            %vm1092 = vcmask 7168
            %1093 = vst.msk [vmem:[%s344] sm:$0xff] %vm1092, %v1090
            %1094 = vst.msk [vmem:[%s344 + $0x8] sm:$0xff] %vm1092, %v1091
            %v1095 = vld [vmem:[%s353] sm:$0xff]
            %v1096 = vld [vmem:[%s353 + $0x8] sm:$0xff]
            %v1097 = vmul.f32 %v1065, %v1065
            %v1098 = vmul.f32 %v1066, %v1066
            %v1099 = vmul.f32 %v1067, %v1067
            %v1100 = vmul.f32 %v1068, %v1068
            %v1101 = vadd.f32 %v1097, %v1098
            %1102 = vadd.xlane.f32.xlu0 %v1101
            %v1103 = vpop.xlane.xlu0 %1102
            %v1104 = vadd.f32 %v1099, %v1100
            %1105 = vadd.xlane.f32.xlu0 %v1104
            %v1106 = vpop.xlane.xlu0 %1105
            %v1107 = vadd.f32 %v1095, %v1103
            %v1108 = vadd.f32 %v1096, %v1106
            %1109 = vst.msk [vmem:[%s353] sm:$0xff] %vm1092, %v1107
            %1110 = vst.msk [vmem:[%s353 + $0x8] sm:$0xff] %vm1092, %v1108
          $region47: #{tpu_custom_call.1} parent=40 // pred_fallthru
            _
          %p1111 = scmp.gt.s32.totalorder %s1077, 2661
          // Predicated region
          $region48: #{tpu_custom_call.1} parent=40 // pred_check
            %p1112 = pneg %p1111
          $region49: #{tpu_custom_call.1} parent=40 // pred_check_branch
            %1114 = sbr.rel (%p1112) target = $region51
          $region50: #{tpu_custom_call.1} parent=40 // pred_region
            %v1115 = vadd.s32 %v493, 128
            %v1116 = vstv %s1076
            %v1117 = vadd.s32 %v1116, %v493
            %v1118 = vadd.s32 %v1116, %v1115
            %vm1119 = vcmp.lt.s32.totalorder %v1117, 2661
            %vm1120 = vcmp.lt.s32.totalorder %v1118, 2661
            %v1121 = vsel %vm1119, 1, 0
            %v1122 = vsel %vm1120, 1, 0
            %vm1123 = vcmp.eq.s32.totalorder %v1121, 1
            %vm1124 = vcmp.eq.s32.totalorder %v1122, 1
            %v1125 = vsel %vm1123, %v1065, 0.0
            %v1126 = vsel %vm1124, %v1066, 0.0
            %v1127 = vsel %vm1123, %v1067, 0.0
            %v1128 = vsel %vm1124, %v1068, 0.0
            %v1129 = vld [vmem:[%s344] sm:$0xff]
            %v1130 = vld [vmem:[%s344 + $0x8] sm:$0xff]
            %v1131 = vadd.f32 %v1125, %v1126
            %1132 = vadd.xlane.f32.xlu0 %v1131
            %v1133 = vpop.xlane.xlu0 %1132
            %v1134 = vadd.f32 %v1127, %v1128
            %1135 = vadd.xlane.f32.xlu0 %v1134
            %v1136 = vpop.xlane.xlu0 %1135
            %v1137 = vadd.f32 %v1129, %v1133
            %v1138 = vadd.f32 %v1130, %v1136
            %vm1139 = vcmask 7168
            %1140 = vst.msk [vmem:[%s344] sm:$0xff] %vm1139, %v1137
            %1141 = vst.msk [vmem:[%s344 + $0x8] sm:$0xff] %vm1139, %v1138
            %v1142 = vld [vmem:[%s353] sm:$0xff]
            %v1143 = vld [vmem:[%s353 + $0x8] sm:$0xff]
            %v1144 = vmul.f32 %v1125, %v1125
            %v1145 = vmul.f32 %v1126, %v1126
            %v1146 = vmul.f32 %v1127, %v1127
            %v1147 = vmul.f32 %v1128, %v1128
            %v1148 = vadd.f32 %v1144, %v1145
            %1149 = vadd.xlane.f32.xlu0 %v1148
            %v1150 = vpop.xlane.xlu0 %1149
            %v1151 = vadd.f32 %v1146, %v1147
            %1152 = vadd.xlane.f32.xlu0 %v1151
            %v1153 = vpop.xlane.xlu0 %1152
            %v1154 = vadd.f32 %v1142, %v1150
            %v1155 = vadd.f32 %v1143, %v1153
            %1156 = vst.msk [vmem:[%s353] sm:$0xff] %vm1139, %v1154
            %1157 = vst.msk [vmem:[%s353 + $0x8] sm:$0xff] %vm1139, %v1155
          $region51: #{tpu_custom_call.1} parent=40 // pred_fallthru
            _
        $region41: #{tpu_custom_call.1} parent=31 // loop_footer
          %s387 = sadd.s32 1, %s383
        $region42: #{tpu_custom_call.1} parent=31 // loop_footer_branch
          %382 = sbr.rel target = $region38
        $region43: #{tpu_custom_call.1} parent=31 // loop_exit
          _
        %s1158 = sand.u32 %s132, 1
        %s1159 = scalar_lea.sflag [#allocation4], %s1158
        %s1160 = sand.u32 %s132, 1
        %s1161 = smul.addr %s1160, 256
        %s1162 = scalar_lea.vmem [#allocation3], %s1161
        %p1163 = scmp.lt.s32.totalorder %s25, 1
        %s1164 = scalar_select %p1163, %s25, 1
        %p1165 = scmp.lt.s32.totalorder %s26, 1
        %s1166 = scalar_select %p1165, %s26, 1
        %s1167 = smul.addr %s1166, 2
        %s1168 = smul.addr %s1164, 4
        %s1169 = sadd.s32 %s1167, %s1168
        %s1170 = smul.addr %s1169, 8
        %s1171 = scalar_lea.vmem %s4, %s1170
        %p1172 = scmp.lt.s32.totalorder %s25, 1
        %s1173 = scalar_select %p1172, %s25, 1
        %p1174 = scmp.lt.s32.totalorder %s26, 1
        %s1175 = scalar_select %p1174, %s26, 1
        %s1176 = smul.addr %s1175, 2
        %s1177 = smul.addr %s1173, 4
        %s1178 = sadd.s32 %s1176, %s1177
        %s1179 = smul.addr %s1178, 8
        %s1180 = scalar_lea.vmem %s5, %s1179
        // Predicated region
        $region52: #{tpu_custom_call.1} parent=31 // pred_check
          %p1181 = pneg %p142
        $region53: #{tpu_custom_call.1} parent=31 // pred_check_branch
          %1183 = sbr.rel (%p1181) target = $region55
        $region54: #{tpu_custom_call.1} parent=31 // pred_region
          %s1184 = sadd.s32 %s26, %s27
          %s1185 = smul.u32 16, %s1184
          %1187 = vsyncadd %s1159, 0
          %s1188 = smul.addr %s25, 64
          %s1189 = sadd.s32 %s1185, %s1188
          %s1190 = smul.addr %s1189, 8
          %s1191 = scalar_lea.hbm %s3, %s1190
          %s1192 = sshll.u32 %s1162, 4
          %s1193 = int_to_ptr.vmem [resolvable:$true] %s1192
          %s1194 = sshll.u32 %s1191, 4
          %s1195 = int_to_ptr.hbm [resolvable:$true] %s1194
          %1200 = dma.vmem_to_hbm [thread:$0]  %s1193, 4096, %s1195, %s1159, 2048, 4096, 128
        $region55: #{tpu_custom_call.1} parent=31 // pred_fallthru
          _
        // Predicated region
        $region56: #{tpu_custom_call.1} parent=31 // pred_check
          %p1201 = pneg %p170
        $region57: #{tpu_custom_call.1} parent=31 // pred_check_branch
          %1203 = sbr.rel (%p1201) target = $region59
        $region58: #{tpu_custom_call.1} parent=31 // pred_region
          _
        $region59: #{tpu_custom_call.1} parent=31 // pred_fallthru
          _
        // Predicated region
        $region60: #{tpu_custom_call.1} parent=31 // pred_check
          %p1204 = pneg %p198
        $region61: #{tpu_custom_call.1} parent=31 // pred_check_branch
          %1206 = sbr.rel (%p1204) target = $region63
        $region62: #{tpu_custom_call.1} parent=31 // pred_region
          _
        $region63: #{tpu_custom_call.1} parent=31 // pred_fallthru
          _
      $region32: #{tpu_custom_call.1} parent=5 // pred_fallthru
        _
      %p1207 = scmp.le.s32.totalorder 2, %s15
      // Predicated region
      $region64: #{tpu_custom_call.1} parent=5 // pred_check
        %p1208 = pneg %p1207
      $region65: #{tpu_custom_call.1} parent=5 // pred_check_branch
        %1210 = sbr.rel (%p1208) target = $region67
      $region66: #{tpu_custom_call.1} parent=5 // pred_region
        %s1211 = ssub.s32 %s15, 2
        // Predicated region
        $region68: #{tpu_custom_call.1} parent=66 // pred_check
          %p1212 = pneg %p148
        $region69: #{tpu_custom_call.1} parent=66 // pred_check_branch
          %1214 = sbr.rel (%p1212) target = $region71
        $region70: #{tpu_custom_call.1} parent=66 // pred_region
          %s1215 = sand.u32 %s133, 1
          %s1216 = scalar_lea.sflag [#allocation4], %s1215
          %s1217 = sand.u32 %s133, 1
          %s1218 = smul.addr %s1217, 256
          %s1219 = scalar_lea.vmem [#allocation3], %s1218
          %1221 = dma.done %s1216, 4096
        $region71: #{tpu_custom_call.1} parent=66 // pred_fallthru
          _
        // Predicated region
        $region72: #{tpu_custom_call.1} parent=66 // pred_check
          %p1222 = pneg %p176
        $region73: #{tpu_custom_call.1} parent=66 // pred_check_branch
          %1224 = sbr.rel (%p1222) target = $region75
        $region74: #{tpu_custom_call.1} parent=66 // pred_region
          %p1225 = scmp.lt.s32.totalorder %s28, 1
          %s1226 = scalar_select %p1225, %s28, 1
          %p1227 = scmp.lt.s32.totalorder %s29, 1
          %s1228 = scalar_select %p1227, %s29, 1
          %s1229 = smul.addr %s1228, 2
          %s1230 = smul.addr %s1226, 4
          %s1231 = sadd.s32 %s1229, %s1230
          %s1232 = smul.addr %s1231, 8
          %s1233 = scalar_lea.vmem %s4, %s1232
        $region75: #{tpu_custom_call.1} parent=66 // pred_fallthru
          _
        // Predicated region
        $region76: #{tpu_custom_call.1} parent=66 // pred_check
          %p1234 = pneg %p204
        $region77: #{tpu_custom_call.1} parent=66 // pred_check_branch
          %1236 = sbr.rel (%p1234) target = $region79
        $region78: #{tpu_custom_call.1} parent=66 // pred_region
          %p1237 = scmp.lt.s32.totalorder %s28, 1
          %s1238 = scalar_select %p1237, %s28, 1
          %p1239 = scmp.lt.s32.totalorder %s29, 1
          %s1240 = scalar_select %p1239, %s29, 1
          %s1241 = smul.addr %s1240, 2
          %s1242 = smul.addr %s1238, 4
          %s1243 = sadd.s32 %s1241, %s1242
          %s1244 = smul.addr %s1243, 8
          %s1245 = scalar_lea.vmem %s5, %s1244
        $region79: #{tpu_custom_call.1} parent=66 // pred_fallthru
          _
      $region67: #{tpu_custom_call.1} parent=5 // pred_fallthru
        _
    $region6: #{tpu_custom_call.1} parent=1 // loop_footer
      %s19 = sadd.s32 1, %s15
    $region7: #{tpu_custom_call.1} parent=1 // loop_footer_branch
      %14 = sbr.rel target = $region3
    $region8: #{tpu_custom_call.1} parent=1 // loop_exit
      _
    %1246 = vsyncpa [#allocation4], 1
    %s1247 = scalar_lea.sflag [#allocation4], 1
    %1248 = vsyncpa %s1247, 1

</llo_original>
